<compile_context>
chip_gen: v7x
topology: tpu7x:2x2x1
jax: 0.10.0
libtpu: 0.0.40
codegen_flags: <defaults>
</compile_context>

<pallas_src>
import math

import jax
import jax.numpy as jnp
from jax.experimental import pallas as pl
from jax.experimental.pallas import tpu as pltpu

_OUT = 784  # 28 * 28


def _generator_kernel(x_ref,
                      w1_ref, b1_ref,
                      w2_ref, b2_ref,
                      w3_ref, b3_ref,
                      w4_ref, b4_ref,
                      o_ref):
    """One batch tile of the fused MLP: broadcast first layer + 3 bf16 MXU matmuls."""
    x = x_ref[...]                                     # (TB, 1) f32

    # Layer 1 (K=1): VPU broadcast outer product instead of a degenerate matmul.
    h = jnp.maximum(x * w1_ref[...] + b1_ref[...], 0.0)          # (TB, 64) f32

    # Layers 2-4 on the MXU: bf16 operands, f32 accumulation, f32 bias/ReLU.
    h = jnp.dot(h.astype(jnp.bfloat16), w2_ref[...],
                preferred_element_type=jnp.float32) + b2_ref[...]
    h = jnp.maximum(h, 0.0)                                       # (TB, 256)

    h = jnp.dot(h.astype(jnp.bfloat16), w3_ref[...],
                preferred_element_type=jnp.float32) + b3_ref[...]
    h = jnp.maximum(h, 0.0)                                       # (TB, 512)

    h = jnp.dot(h.astype(jnp.bfloat16), w4_ref[...],
                preferred_element_type=jnp.float32) + b4_ref[...]  # (TB, 784)

    # Sigmoid via tanh: sigmoid(h) = 0.5*tanh(0.5*h) + 0.5.
    # Single EUP push per element and saturating (no Inf/NaN for large |h|).
    o_ref[...] = 0.5 * jnp.tanh(0.5 * h) + 0.5


def prepare_params(params):
    """One-time parameter prep (do NOT run per forward call):
       cast the MXU weights to bf16; keep layer-1 weight and all biases f32."""
    (w1, b1), (w2, b2), (w3, b3), (w4, b4) = params
    return (w1.astype(jnp.float32), b1.astype(jnp.float32),
            w2.astype(jnp.bfloat16), b2.astype(jnp.float32),
            w3.astype(jnp.bfloat16), b3.astype(jnp.float32),
            w4.astype(jnp.bfloat16), b4.astype(jnp.float32))


def generator_forward(x, prepped, *, batch_tile=512):
    """x: (B, 1) float32, prepped = prepare_params(params).
       Returns (B, 28, 28) float32."""
    w1, b1, w2, b2, w3, b3, w4, b4 = prepped
    B = x.shape[0]

    # Batch tile: multiple of 8 sublanes, sized so the grid has >= 2 steps
    # when possible (keeps both v7x TensorCores busy), capped at batch_tile.
    half = pl.cdiv(B, 2)
    TB = max(8, min(batch_tile, pl.cdiv(half, 8) * 8))
    Bp = pl.cdiv(B, TB) * TB
    xp = jnp.pad(x, ((0, Bp - B), (0, 0))) if Bp != B else x
    grid = (Bp // TB,)

    # Activations/output tile over batch; weights/biases use constant block
    # indices so they are fetched into VMEM once and stay resident.
    act_in_spec = pl.BlockSpec((TB, 1), lambda i: (i, 0))
    out_spec = pl.BlockSpec((TB, _OUT), lambda i: (i, 0))

    def resident(a):
        return pl.BlockSpec(a.shape, lambda i: (0, 0))

    flops = 2 * Bp * (1 * 64 + 64 * 256 + 256 * 512 + 512 * _OUT)
    bytes_accessed = (
        w1.size * 4 + b1.size * 4
        + w2.size * 2 + b2.size * 4
        + w3.size * 2 + b3.size * 4
        + w4.size * 2 + b4.size * 4
        + 4 * Bp * (1 + _OUT))
    cost = pl.CostEstimate(flops=flops,
                           transcendentals=Bp * _OUT,
                           bytes_accessed=bytes_accessed)

    out = pl.pallas_call(
        _generator_kernel,
        out_shape=jax.ShapeDtypeStruct((Bp, _OUT), jnp.float32),
        grid=grid,
        in_specs=[act_in_spec,
                  resident(w1), resident(b1),
                  resident(w2), resident(b2),
                  resident(w3), resident(b3),
                  resident(w4), resident(b4)],
        out_specs=out_spec,
        compiler_params=pltpu.CompilerParams(
            dimension_semantics=("parallel",),     # shard batch tiles over TCs
            vmem_limit_bytes=32 << 20,
        ),
        cost_estimate=cost,
    )(xp, w1, b1, w2, b2, w3, b3, w4, b4)

    if Bp != B:
        out = out[:B]
    # Free reshape: lane-dense 784 output -> (B, 28, 28), like y.reshape(-1,28,28).
    return out.reshape(B, 28, 28)


def init_params(key):
    """Matches Generator._initialize_submodules semantics:
       weight ~ N(0, sqrt(1/in_features)); bias ~ U(-1/sqrt(in), 1/sqrt(in))
       (PyTorch Linear default bias init, not overridden by the module)."""
    dims = [(1, 64), (64, 256), (256, 512), (512, _OUT)]
    params = []
    for (fan_in, fan_out) in dims:
        key, kw, kb = jax.random.split(key, 3)
        std = math.sqrt(1.0 / fan_in)
        w = jax.random.normal(kw, (fan_in, fan_out), dtype=jnp.float32) * std
        bound = 1.0 / math.sqrt(fan_in)
        b = jax.random.uniform(kb, (1, fan_out), dtype=jnp.float32,
                               minval=-bound, maxval=bound)
        params.append((w, b))
    return params


def _reference_forward(x, params):
    """Pure-JAX f32 reference for numerical sanity check."""
    h = x
    for i, (w, b) in enumerate(params):
        h = h @ w + b
        h = jnp.maximum(h, 0.0) if i < 3 else jax.nn.sigmoid(h)
    return h.reshape(-1, 28, 28)


if __name__ == "__main__":
    key = jax.random.PRNGKey(0)
    key, kx = jax.random.split(key)
    params = init_params(key)
    prepped = prepare_params(params)   # one-time: bf16 weight casts hoisted here

    fwd = jax.jit(generator_forward, static_argnames=("batch_tile",))

    # Small batch: single grid step (TB=8).
    B = 8
    x = jax.random.normal(kx, (B, 1), dtype=jnp.float32)
    y = jax.block_until_ready(fwd(x, prepped))
    y_ref = _reference_forward(x, params)
    assert y.shape == (B, 28, 28)
    err = float(jnp.max(jnp.abs(y - y_ref)))
    assert jnp.allclose(y, y_ref, atol=2e-2, rtol=0), err  # bf16 MXU vs f32 ref

    # Multi-tile path: grid > 1 with batch padding (exercises resident weights,
    # batch-tiled activations, and the unpadded 784-lane output path).
    key, kx2 = jax.random.split(key)
    B2 = 300
    x2 = jax.random.normal(kx2, (B2, 1), dtype=jnp.float32)
    y2 = jax.block_until_ready(fwd(x2, prepped, batch_tile=128))
    y2_ref = _reference_forward(x2, params)
    assert y2.shape == (B2, 28, 28)
    err2 = float(jnp.max(jnp.abs(y2 - y2_ref)))
    assert jnp.allclose(y2, y2_ref, atol=2e-2, rtol=0), err2

    print("KERNEL_OK")
</pallas_src>

<mosaic_0001>
module attributes {stable_mosaic.version = 11 : i64} {
  func.func @_generator_kernel(%arg0: i32, %arg1: memref<8x1xf32, #tpu.memory_space<vmem>>, %arg2: memref<1x64xf32, #tpu.memory_space<vmem>>, %arg3: memref<1x64xf32, #tpu.memory_space<vmem>>, %arg4: memref<64x256xbf16, #tpu.memory_space<vmem>>, %arg5: memref<1x256xf32, #tpu.memory_space<vmem>>, %arg6: memref<256x512xbf16, #tpu.memory_space<vmem>>, %arg7: memref<1x512xf32, #tpu.memory_space<vmem>>, %arg8: memref<512x784xbf16, #tpu.memory_space<vmem>>, %arg9: memref<1x784xf32, #tpu.memory_space<vmem>>, %arg10: memref<8x784xf32, #tpu.memory_space<vmem>>) attributes {dimension_semantics = [#tpu.dimension_semantics<parallel>], iteration_bounds = array<i64: 1>, scalar_prefetch = 0 : i64, scratch_operands = 0 : i64, tpu.core_type = #tpu.core_type<tc>, window_params = [{transform_indices = @transform_0, window_bounds = array<i64: 8, 1>}, {pipeline_mode = #tpu.pipeline_mode<synchronous>, transform_indices = @transform_1, window_bounds = array<i64: 1, 64>}, {pipeline_mode = #tpu.pipeline_mode<synchronous>, transform_indices = @transform_2, window_bounds = array<i64: 1, 64>}, {pipeline_mode = #tpu.pipeline_mode<synchronous>, transform_indices = @transform_3, window_bounds = array<i64: 64, 256>}, {pipeline_mode = #tpu.pipeline_mode<synchronous>, transform_indices = @transform_4, window_bounds = array<i64: 1, 256>}, {pipeline_mode = #tpu.pipeline_mode<synchronous>, transform_indices = @transform_5, window_bounds = array<i64: 256, 512>}, {pipeline_mode = #tpu.pipeline_mode<synchronous>, transform_indices = @transform_6, window_bounds = array<i64: 1, 512>}, {pipeline_mode = #tpu.pipeline_mode<synchronous>, transform_indices = @transform_7, window_bounds = array<i64: 512, 784>}, {pipeline_mode = #tpu.pipeline_mode<synchronous>, transform_indices = @transform_8, window_bounds = array<i64: 1, 784>}, {transform_indices = @transform_9, window_bounds = array<i64: 8, 784>}]} {
    %c0 = arith.constant 0 : index
    %c0_0 = arith.constant 0 : index
    %0 = vector.load %arg1[%c0, %c0_0] : memref<8x1xf32, #tpu.memory_space<vmem>>, vector<8x1xf32>
    %c0_1 = arith.constant 0 : index
    %c0_2 = arith.constant 0 : index
    %1 = vector.load %arg2[%c0_1, %c0_2] : memref<1x64xf32, #tpu.memory_space<vmem>>, vector<1x64xf32>
    %2 = vector.broadcast %0 : vector<8x1xf32> to vector<8x64xf32>
    %3 = vector.broadcast %1 : vector<1x64xf32> to vector<8x64xf32>
    %4 = arith.mulf %2, %3 : vector<8x64xf32>
    %c0_3 = arith.constant 0 : index
    %c0_4 = arith.constant 0 : index
    %5 = vector.load %arg3[%c0_3, %c0_4] : memref<1x64xf32, #tpu.memory_space<vmem>>, vector<1x64xf32>
    %6 = vector.broadcast %5 : vector<1x64xf32> to vector<8x64xf32>
    %7 = arith.addf %4, %6 : vector<8x64xf32>
    %cst = arith.constant 0.000000e+00 : f32
    %8 = vector.broadcast %cst : f32 to vector<8x64xf32>
    %9 = arith.maximumf %7, %8 : vector<8x64xf32>
    %10 = arith.truncf %9 : vector<8x64xf32> to vector<8x64xbf16>
    %c0_5 = arith.constant 0 : index
    %c0_6 = arith.constant 0 : index
    %11 = vector.load %arg4[%c0_5, %c0_6] : memref<64x256xbf16, #tpu.memory_space<vmem>>, vector<64x256xbf16>
    %cst_7 = arith.constant dense<0.000000e+00> : vector<8x256xf32>
    %12 = tpu.matmul %10, %11, %cst_7 {dimension_numbers = #tpu.dot_dimension_numbers<[1], [0], [0], [1], [0, 0, 1, 1], [], []>} : vector<8x64xbf16>, vector<64x256xbf16>, vector<8x256xf32> -> vector<8x256xf32>
    %c0_8 = arith.constant 0 : index
    %c0_9 = arith.constant 0 : index
    %13 = vector.load %arg5[%c0_8, %c0_9] : memref<1x256xf32, #tpu.memory_space<vmem>>, vector<1x256xf32>
    %14 = vector.broadcast %13 : vector<1x256xf32> to vector<8x256xf32>
    %15 = arith.addf %12, %14 : vector<8x256xf32>
    %cst_10 = arith.constant 0.000000e+00 : f32
    %16 = vector.broadcast %cst_10 : f32 to vector<8x256xf32>
    %17 = arith.maximumf %15, %16 : vector<8x256xf32>
    %18 = arith.truncf %17 : vector<8x256xf32> to vector<8x256xbf16>
    %c0_11 = arith.constant 0 : index
    %c0_12 = arith.constant 0 : index
    %19 = vector.load %arg6[%c0_11, %c0_12] : memref<256x512xbf16, #tpu.memory_space<vmem>>, vector<256x512xbf16>
    %cst_13 = arith.constant dense<0.000000e+00> : vector<8x512xf32>
    %20 = tpu.matmul %18, %19, %cst_13 {dimension_numbers = #tpu.dot_dimension_numbers<[1], [0], [0], [1], [0, 0, 1, 1], [], []>} : vector<8x256xbf16>, vector<256x512xbf16>, vector<8x512xf32> -> vector<8x512xf32>
    %c0_14 = arith.constant 0 : index
    %c0_15 = arith.constant 0 : index
    %21 = vector.load %arg7[%c0_14, %c0_15] : memref<1x512xf32, #tpu.memory_space<vmem>>, vector<1x512xf32>
    %22 = vector.broadcast %21 : vector<1x512xf32> to vector<8x512xf32>
    %23 = arith.addf %20, %22 : vector<8x512xf32>
    %cst_16 = arith.constant 0.000000e+00 : f32
    %24 = vector.broadcast %cst_16 : f32 to vector<8x512xf32>
    %25 = arith.maximumf %23, %24 : vector<8x512xf32>
    %26 = arith.truncf %25 : vector<8x512xf32> to vector<8x512xbf16>
    %c0_17 = arith.constant 0 : index
    %c0_18 = arith.constant 0 : index
    %27 = vector.load %arg8[%c0_17, %c0_18] : memref<512x784xbf16, #tpu.memory_space<vmem>>, vector<512x784xbf16>
    %cst_19 = arith.constant dense<0.000000e+00> : vector<8x784xf32>
    %28 = tpu.matmul %26, %27, %cst_19 {dimension_numbers = #tpu.dot_dimension_numbers<[1], [0], [0], [1], [0, 0, 1, 1], [], []>} : vector<8x512xbf16>, vector<512x784xbf16>, vector<8x784xf32> -> vector<8x784xf32>
    %c0_20 = arith.constant 0 : index
    %c0_21 = arith.constant 0 : index
    %29 = vector.load %arg9[%c0_20, %c0_21] : memref<1x784xf32, #tpu.memory_space<vmem>>, vector<1x784xf32>
    %30 = vector.broadcast %29 : vector<1x784xf32> to vector<8x784xf32>
    %31 = arith.addf %28, %30 : vector<8x784xf32>
    %cst_22 = arith.constant 5.000000e-01 : f32
    %32 = vector.broadcast %cst_22 : f32 to vector<8x784xf32>
    %33 = arith.mulf %32, %31 : vector<8x784xf32>
    %34 = math.tanh %33 : vector<8x784xf32>
    %cst_23 = arith.constant 5.000000e-01 : f32
    %35 = vector.broadcast %cst_23 : f32 to vector<8x784xf32>
    %36 = arith.mulf %35, %34 : vector<8x784xf32>
    %cst_24 = arith.constant 5.000000e-01 : f32
    %37 = vector.broadcast %cst_24 : f32 to vector<8x784xf32>
    %38 = arith.addf %36, %37 : vector<8x784xf32>
    %c0_25 = arith.constant 0 : index
    %c0_26 = arith.constant 0 : index
    %39 = vector.load %arg10[%c0_25, %c0_26] : memref<8x784xf32, #tpu.memory_space<vmem>>, vector<8x784xf32>
    tpu.vector_store %arg10[%c0_25, %c0_26], %38 {strides = array<i32>} : memref<8x784xf32, #tpu.memory_space<vmem>>, vector<8x784xf32>,
    return
  }
  func.func @transform_0(%arg0: i32) -> (i32, i32) {
    %c0_i32 = arith.constant 0 : i32
    %c0_i32_0 = arith.constant 0 : i32
    return %arg0, %c0_i32 : i32, i32
  }
  func.func @transform_1(%arg0: i32) -> (i32, i32) {
    %c0_i32 = arith.constant 0 : i32
    %c0_i32_0 = arith.constant 0 : i32
    %c0_i32_1 = arith.constant 0 : i32
    return %c0_i32, %c0_i32_0 : i32, i32
  }
  func.func @transform_2(%arg0: i32) -> (i32, i32) {
    %c0_i32 = arith.constant 0 : i32
    %c0_i32_0 = arith.constant 0 : i32
    %c0_i32_1 = arith.constant 0 : i32
    return %c0_i32, %c0_i32_0 : i32, i32
  }
  func.func @transform_3(%arg0: i32) -> (i32, i32) {
    %c0_i32 = arith.constant 0 : i32
    %c0_i32_0 = arith.constant 0 : i32
    %c0_i32_1 = arith.constant 0 : i32
    return %c0_i32, %c0_i32_0 : i32, i32
  }
  func.func @transform_4(%arg0: i32) -> (i32, i32) {
    %c0_i32 = arith.constant 0 : i32
    %c0_i32_0 = arith.constant 0 : i32
    %c0_i32_1 = arith.constant 0 : i32
    return %c0_i32, %c0_i32_0 : i32, i32
  }
  func.func @transform_5(%arg0: i32) -> (i32, i32) {
    %c0_i32 = arith.constant 0 : i32
    %c0_i32_0 = arith.constant 0 : i32
    %c0_i32_1 = arith.constant 0 : i32
    return %c0_i32, %c0_i32_0 : i32, i32
  }
  func.func @transform_6(%arg0: i32) -> (i32, i32) {
    %c0_i32 = arith.constant 0 : i32
    %c0_i32_0 = arith.constant 0 : i32
    %c0_i32_1 = arith.constant 0 : i32
    return %c0_i32, %c0_i32_0 : i32, i32
  }
  func.func @transform_7(%arg0: i32) -> (i32, i32) {
    %c0_i32 = arith.constant 0 : i32
    %c0_i32_0 = arith.constant 0 : i32
    %c0_i32_1 = arith.constant 0 : i32
    return %c0_i32, %c0_i32_0 : i32, i32
  }
  func.func @transform_8(%arg0: i32) -> (i32, i32) {
    %c0_i32 = arith.constant 0 : i32
    %c0_i32_0 = arith.constant 0 : i32
    %c0_i32_1 = arith.constant 0 : i32
    return %c0_i32, %c0_i32_0 : i32, i32
  }
  func.func @transform_9(%arg0: i32) -> (i32, i32) {
    %c0_i32 = arith.constant 0 : i32
    %c0_i32_0 = arith.constant 0 : i32
    return %arg0, %c0_i32 : i32, i32
  }
}

</mosaic_0001>

<llo_original>
// kernel: generator_forward.1
$region0: #{generator_forward.1}
  #allocation0 [shape = 'u32[]', space=smem, size = 0x4, offset = 0x4, fixed_abs, tag = 'smem constant byte address 0x4 - core index']
  #allocation1 [shape = 'u32[144,128]{1,0:T(1,128)}', space=vmem, size = 0x12000, scoped, tag = 'internal scratch']
  %s0 = inlined_call_operand.vmem [shape: f32[8,1], index: 0, kind: input, shape index: {}]
  %s1 = inlined_call_operand.vmem [shape: f32[1,64], index: 1, kind: input, shape index: {}]
  %s2 = inlined_call_operand.vmem [shape: f32[1,64], index: 2, kind: input, shape index: {}]
  %s3 = inlined_call_operand.vmem [shape: bf16[64,256], index: 3, kind: input, shape index: {}]
  %s4 = inlined_call_operand.vmem [shape: f32[1,256], index: 4, kind: input, shape index: {}]
  %s5 = inlined_call_operand.vmem [shape: bf16[256,512], index: 5, kind: input, shape index: {}]
  %s6 = inlined_call_operand.vmem [shape: f32[1,512], index: 6, kind: input, shape index: {}]
  %s7 = inlined_call_operand.vmem [shape: bf16[512,784], index: 7, kind: input, shape index: {}]
  %s8 = inlined_call_operand.vmem [shape: f32[1,784], index: 8, kind: input, shape index: {}]
  %s9 = inlined_call_operand.vmem [shape: f32[8,784], index: 9, kind: output, shape index: {}]
  %s10 = sld [smem:[#allocation0]]
  $region46: #{generator_forward.1} parent=0
    _
  %s12 = ssub.s32 1, %s10
  %s13 = scalar_select 0, %s12, %s10
  // Predicated region
  $region2: #{generator_forward.1} parent=0 // pred_check
    _
  $region3: #{generator_forward.1} parent=0 // pred_check_branch
    %15 = sbr.rel (0) target = $region5
  $region4: #{generator_forward.1} parent=0 // pred_region
    _
  $region5: #{generator_forward.1} parent=0 // pred_fallthru
    _
  // Predicated region
  $region6: #{generator_forward.1} parent=0 // pred_check
    _
  $region7: #{generator_forward.1} parent=0 // pred_check_branch
    %17 = sbr.rel (0) target = $region9
  $region8: #{generator_forward.1} parent=0 // pred_region
    _
  $region9: #{generator_forward.1} parent=0 // pred_fallthru
    _
  // Predicated region
  $region10: #{generator_forward.1} parent=0 // pred_check
    _
  $region11: #{generator_forward.1} parent=0 // pred_check_branch
    %19 = sbr.rel (0) target = $region13
  $region12: #{generator_forward.1} parent=0 // pred_region
    _
  $region13: #{generator_forward.1} parent=0 // pred_fallthru
    _
  // Predicated region
  $region14: #{generator_forward.1} parent=0 // pred_check
    _
  $region15: #{generator_forward.1} parent=0 // pred_check_branch
    %21 = sbr.rel (0) target = $region17
  $region16: #{generator_forward.1} parent=0 // pred_region
    _
  $region17: #{generator_forward.1} parent=0 // pred_fallthru
    _
  // Predicated region
  $region18: #{generator_forward.1} parent=0 // pred_check
    _
  $region19: #{generator_forward.1} parent=0 // pred_check_branch
    %23 = sbr.rel (0) target = $region21
  $region20: #{generator_forward.1} parent=0 // pred_region
    _
  $region21: #{generator_forward.1} parent=0 // pred_fallthru
    _
  // Predicated region
  $region22: #{generator_forward.1} parent=0 // pred_check
    _
  $region23: #{generator_forward.1} parent=0 // pred_check_branch
    %25 = sbr.rel (0) target = $region25
  $region24: #{generator_forward.1} parent=0 // pred_region
    _
  $region25: #{generator_forward.1} parent=0 // pred_fallthru
    _
  // Predicated region
  $region26: #{generator_forward.1} parent=0 // pred_check
    _
  $region27: #{generator_forward.1} parent=0 // pred_check_branch
    %27 = sbr.rel (0) target = $region29
  $region28: #{generator_forward.1} parent=0 // pred_region
    _
  $region29: #{generator_forward.1} parent=0 // pred_fallthru
    _
  // Predicated region
  $region30: #{generator_forward.1} parent=0 // pred_check
    _
  $region31: #{generator_forward.1} parent=0 // pred_check_branch
    %29 = sbr.rel (0) target = $region33
  $region32: #{generator_forward.1} parent=0 // pred_region
    _
  $region33: #{generator_forward.1} parent=0 // pred_fallthru
    _
  // Predicated region
  $region34: #{generator_forward.1} parent=0 // pred_check
    _
  $region35: #{generator_forward.1} parent=0 // pred_check_branch
    %31 = sbr.rel (0) target = $region37
  $region36: #{generator_forward.1} parent=0 // pred_region
    _
  $region37: #{generator_forward.1} parent=0 // pred_fallthru
    _
  %v33 = vld [vmem:[%s0] sm:$0xff]
  %v34 = vld [vmem:[%s1] sm:$0x1]
  %36 = vset.pattern.permute.xlu0 0
  %37 = vperm.xlu0 %36, %v33
  %v38 = vpop.permute.xlu0 %37
  %v41 = vlaneseq
  %v42 = vshrl.u32 %v41, 7
  %v43 = vsub.s32 0, %v42
  %v44 = vrot.slane %v34, %v43
  %v46 = vmul.f32 %v38, %v44
  %v47 = vld [vmem:[%s2] sm:$0x1]
  %v49 = vlaneseq
  %v50 = vshrl.u32 %v49, 7
  %v51 = vsub.s32 0, %v50
  %v52 = vrot.slane %v47, %v51
  %v54 = vadd.f32 %v46, %v52
  %v55 = vmax.f32 %v54, 0.0
  %v56 = vpack.c.bf16 %v55, %v55
  %v57 = vld [vmem:[%s3] sm:$0xff]
  %v58 = vld [vmem:[%s3 + $0x8] sm:$0xff]
  %v59 = vld [vmem:[%s3 + $0x10] sm:$0xff]
  %v60 = vld [vmem:[%s3 + $0x18] sm:$0xff]
  %v61 = vld [vmem:[%s3 + $0x20] sm:$0xff]
  %v62 = vld [vmem:[%s3 + $0x28] sm:$0xff]
  %v63 = vld [vmem:[%s3 + $0x30] sm:$0xff]
  %v64 = vld [vmem:[%s3 + $0x38] sm:$0xff]
  %v65 = vld [vmem:[%s4] sm:$0x3]
  %v67 = vlaneseq
  %v68 = vshrl.u32 %v67, 7
  %v69 = vsub.s32 0, %v68
  %v70 = vrot.slane %v65, %v69
  %v71 = vlaneseq
  %v72 = vshrl.u32 %v71, 7
  %v73 = vsub.s32 1, %v72
  %v74 = vrot.slane %v65, %v73
  %v85 = vunpack.c.l.b16 %v57
  %v86 = vunpack.c.h.b16 %v57
  %v87 = vunpack.c.l.b16 %v58
  %v88 = vunpack.c.h.b16 %v58
  %v89 = vunpack.c.l.b16 %v59
  %v90 = vunpack.c.h.b16 %v59
  %v91 = vunpack.c.l.b16 %v60
  %v92 = vunpack.c.h.b16 %v60
  %v93 = vunpack.c.l.b16 %v61
  %v94 = vunpack.c.h.b16 %v61
  %v95 = vunpack.c.l.b16 %v62
  %v96 = vunpack.c.h.b16 %v62
  %v97 = vunpack.c.l.b16 %v63
  %v98 = vunpack.c.h.b16 %v63
  %v99 = vunpack.c.l.b16 %v64
  %v100 = vunpack.c.h.b16 %v64
  %v101 = vpack.c.b16 %v87, %v85
  %v102 = vpack.c.b16 %v88, %v86
  %v103 = vpack.c.b16 %v91, %v89
  %v104 = vpack.c.b16 %v92, %v90
  %v105 = vpack.c.b16 %v95, %v93
  %v106 = vpack.c.b16 %v96, %v94
  %v107 = vpack.c.b16 %v99, %v97
  %v108 = vpack.c.b16 %v100, %v98
  %vm117 = vcmask 523264
  %v119 = vsel %vm117, %v56, 0
  %121 = vmatprep.subr.bf16.mxu0 %v102
  %122 = vmatpush1.bf16.msra.mxu0 %v101
  %123 = vmatprep.subr.bf16.mxu0 %v104
  %124 = vmatpush1.bf16.msra.mxu0 %v103
  %125 = vmatprep.subr.bf16.mxu0 %v106
  %126 = vmatpush1.bf16.msra.mxu0 %v105
  %127 = vmatprep.subr.bf16.mxu0 %v108
  %128 = vmatpush1.bf16.msra.mxu0 %v107
  %129 = vmatprep.subr.bf16.mxu0 0
  %130 = vmatpush1.bf16.msra.mxu0 0
  %131 = vmatprep.subr.bf16.mxu0 0
  %132 = vmatpush1.bf16.msra.mxu0 0
  %133 = vmatprep.subr.bf16.mxu0 0
  %134 = vmatpush1.bf16.msra.mxu0 0
  %135 = vmatprep.subr.bf16.mxu0 0
  %136 = vmatpush1.bf16.msra.mxu0 0
  %137 = vmatprep.subr.bf16.mxu0 0
  %138 = vmatpush1.bf16.msra.mxu0 0
  %139 = vmatprep.subr.bf16.mxu0 0
  %140 = vmatpush1.bf16.msra.mxu0 0
  %141 = vmatprep.subr.bf16.mxu0 0
  %142 = vmatpush1.bf16.msra.mxu0 0
  %143 = vmatprep.subr.bf16.mxu0 0
  %144 = vmatpush1.bf16.msra.mxu0 0
  %145 = vmatprep.subr.bf16.mxu0 0
  %146 = vmatpush1.bf16.msra.mxu0 0
  %147 = vmatprep.subr.bf16.mxu0 0
  %148 = vmatpush1.bf16.msra.mxu0 0
  %149 = vmatprep.subr.bf16.mxu0 0
  %150 = vmatpush1.bf16.msra.mxu0 0
  %151 = vmatprep.subr.bf16.mxu0 0
  %152 = vmatpush1.bf16.msra.mxu0 0
  %153 = vmatprep.mubr.bf16.mxu0 0
  %154 = vmatmul.mubr.bf16.gmra.mrb[0].mxu0 %v119
  %v155 = vpop.f32.mrb[0].mxu0
  %v156 = vadd.f32 %v70, %v155
  %v157 = vpop.f32.mrb[0].mxu0
  %v158 = vadd.f32 %v74, %v157
  %v159 = vpop.f32.mrb[0].mxu0
  %v160 = vpop.f32.mrb[0].mxu0
  %161 = vdwg.mxu0
  %v162 = vmax.f32 %v156, 0.0
  %v163 = vmax.f32 %v158, 0.0
  %v164 = vpack.c.bf16 %v162, %v162
  %v165 = vpack.c.bf16 %v163, %v163
  %v166 = vld [vmem:[%s5] sm:$0xff]
  %v167 = vld [vmem:[%s5 + $0x8] sm:$0xff]
  %v168 = vld [vmem:[%s5 + $0x10] sm:$0xff]
  %v169 = vld [vmem:[%s5 + $0x18] sm:$0xff]
  %v170 = vld [vmem:[%s5 + $0x20] sm:$0xff]
  %v171 = vld [vmem:[%s5 + $0x28] sm:$0xff]
  %v172 = vld [vmem:[%s5 + $0x30] sm:$0xff]
  %v173 = vld [vmem:[%s5 + $0x38] sm:$0xff]
  %v174 = vld [vmem:[%s5 + $0x40] sm:$0xff]
  %v175 = vld [vmem:[%s5 + $0x48] sm:$0xff]
  %v176 = vld [vmem:[%s5 + $0x50] sm:$0xff]
  %v177 = vld [vmem:[%s5 + $0x58] sm:$0xff]
  %v178 = vld [vmem:[%s5 + $0x60] sm:$0xff]
  %v179 = vld [vmem:[%s5 + $0x68] sm:$0xff]
  %v180 = vld [vmem:[%s5 + $0x70] sm:$0xff]
  %v181 = vld [vmem:[%s5 + $0x78] sm:$0xff]
  %v182 = vld [vmem:[%s5 + $0x80] sm:$0xff]
  %v183 = vld [vmem:[%s5 + $0x88] sm:$0xff]
  %v184 = vld [vmem:[%s5 + $0x90] sm:$0xff]
  %v185 = vld [vmem:[%s5 + $0x98] sm:$0xff]
  %v186 = vld [vmem:[%s5 + $0xa0] sm:$0xff]
  %v187 = vld [vmem:[%s5 + $0xa8] sm:$0xff]
  %v188 = vld [vmem:[%s5 + $0xb0] sm:$0xff]
  %v189 = vld [vmem:[%s5 + $0xb8] sm:$0xff]
  %v190 = vld [vmem:[%s5 + $0xc0] sm:$0xff]
  %v191 = vld [vmem:[%s5 + $0xc8] sm:$0xff]
  %v192 = vld [vmem:[%s5 + $0xd0] sm:$0xff]
  %v193 = vld [vmem:[%s5 + $0xd8] sm:$0xff]
  %v194 = vld [vmem:[%s5 + $0xe0] sm:$0xff]
  %v195 = vld [vmem:[%s5 + $0xe8] sm:$0xff]
  %v196 = vld [vmem:[%s5 + $0xf0] sm:$0xff]
  %v197 = vld [vmem:[%s5 + $0xf8] sm:$0xff]
  %v198 = vld [vmem:[%s5 + $0x100] sm:$0xff]
  %v199 = vld [vmem:[%s5 + $0x108] sm:$0xff]
  %v200 = vld [vmem:[%s5 + $0x110] sm:$0xff]
  %v201 = vld [vmem:[%s5 + $0x118] sm:$0xff]
  %v202 = vld [vmem:[%s5 + $0x120] sm:$0xff]
  %v203 = vld [vmem:[%s5 + $0x128] sm:$0xff]
  %v204 = vld [vmem:[%s5 + $0x130] sm:$0xff]
  %v205 = vld [vmem:[%s5 + $0x138] sm:$0xff]
  %v206 = vld [vmem:[%s5 + $0x140] sm:$0xff]
  %v207 = vld [vmem:[%s5 + $0x148] sm:$0xff]
  %v208 = vld [vmem:[%s5 + $0x150] sm:$0xff]
  %v209 = vld [vmem:[%s5 + $0x158] sm:$0xff]
  %v210 = vld [vmem:[%s5 + $0x160] sm:$0xff]
  %v211 = vld [vmem:[%s5 + $0x168] sm:$0xff]
  %v212 = vld [vmem:[%s5 + $0x170] sm:$0xff]
  %v213 = vld [vmem:[%s5 + $0x178] sm:$0xff]
  %v214 = vld [vmem:[%s5 + $0x180] sm:$0xff]
  %v215 = vld [vmem:[%s5 + $0x188] sm:$0xff]
  %v216 = vld [vmem:[%s5 + $0x190] sm:$0xff]
  %v217 = vld [vmem:[%s5 + $0x198] sm:$0xff]
  %v218 = vld [vmem:[%s5 + $0x1a0] sm:$0xff]
  %v219 = vld [vmem:[%s5 + $0x1a8] sm:$0xff]
  %v220 = vld [vmem:[%s5 + $0x1b0] sm:$0xff]
  %v221 = vld [vmem:[%s5 + $0x1b8] sm:$0xff]
  %v222 = vld [vmem:[%s5 + $0x1c0] sm:$0xff]
  %v223 = vld [vmem:[%s5 + $0x1c8] sm:$0xff]
  %v224 = vld [vmem:[%s5 + $0x1d0] sm:$0xff]
  %v225 = vld [vmem:[%s5 + $0x1d8] sm:$0xff]
  %v226 = vld [vmem:[%s5 + $0x1e0] sm:$0xff]
  %v227 = vld [vmem:[%s5 + $0x1e8] sm:$0xff]
  %v228 = vld [vmem:[%s5 + $0x1f0] sm:$0xff]
  %v229 = vld [vmem:[%s5 + $0x1f8] sm:$0xff]
  %v230 = vld [vmem:[%s6] sm:$0xf]
  %v232 = vlaneseq
  %v233 = vshrl.u32 %v232, 7
  %v234 = vsub.s32 0, %v233
  %v235 = vrot.slane %v230, %v234
  %v236 = vlaneseq
  %v237 = vshrl.u32 %v236, 7
  %v238 = vsub.s32 1, %v237
  %v239 = vrot.slane %v230, %v238
  %v240 = vlaneseq
  %v241 = vshrl.u32 %v240, 7
  %v242 = vsub.s32 2, %v241
  %v243 = vrot.slane %v230, %v242
  %v244 = vlaneseq
  %v245 = vshrl.u32 %v244, 7
  %v246 = vsub.s32 3, %v245
  %v247 = vrot.slane %v230, %v246
  %v316 = vunpack.c.l.b16 %v166
  %v317 = vunpack.c.h.b16 %v166
  %v318 = vunpack.c.l.b16 %v167
  %v319 = vunpack.c.h.b16 %v167
  %v320 = vunpack.c.l.b16 %v168
  %v321 = vunpack.c.h.b16 %v168
  %v322 = vunpack.c.l.b16 %v169
  %v323 = vunpack.c.h.b16 %v169
  %v324 = vunpack.c.l.b16 %v170
  %v325 = vunpack.c.h.b16 %v170
  %v326 = vunpack.c.l.b16 %v171
  %v327 = vunpack.c.h.b16 %v171
  %v328 = vunpack.c.l.b16 %v172
  %v329 = vunpack.c.h.b16 %v172
  %v330 = vunpack.c.l.b16 %v173
  %v331 = vunpack.c.h.b16 %v173
  %v332 = vunpack.c.l.b16 %v174
  %v333 = vunpack.c.h.b16 %v174
  %v334 = vunpack.c.l.b16 %v175
  %v335 = vunpack.c.h.b16 %v175
  %v336 = vunpack.c.l.b16 %v176
  %v337 = vunpack.c.h.b16 %v176
  %v338 = vunpack.c.l.b16 %v177
  %v339 = vunpack.c.h.b16 %v177
  %v340 = vunpack.c.l.b16 %v178
  %v341 = vunpack.c.h.b16 %v178
  %v342 = vunpack.c.l.b16 %v179
  %v343 = vunpack.c.h.b16 %v179
  %v344 = vunpack.c.l.b16 %v180
  %v345 = vunpack.c.h.b16 %v180
  %v346 = vunpack.c.l.b16 %v181
  %v347 = vunpack.c.h.b16 %v181
  %v348 = vunpack.c.l.b16 %v182
  %v349 = vunpack.c.h.b16 %v182
  %v350 = vunpack.c.l.b16 %v183
  %v351 = vunpack.c.h.b16 %v183
  %v352 = vunpack.c.l.b16 %v184
  %v353 = vunpack.c.h.b16 %v184
  %v354 = vunpack.c.l.b16 %v185
  %v355 = vunpack.c.h.b16 %v185
  %v356 = vunpack.c.l.b16 %v186
  %v357 = vunpack.c.h.b16 %v186
  %v358 = vunpack.c.l.b16 %v187
  %v359 = vunpack.c.h.b16 %v187
  %v360 = vunpack.c.l.b16 %v188
  %v361 = vunpack.c.h.b16 %v188
  %v362 = vunpack.c.l.b16 %v189
  %v363 = vunpack.c.h.b16 %v189
  %v364 = vunpack.c.l.b16 %v190
  %v365 = vunpack.c.h.b16 %v190
  %v366 = vunpack.c.l.b16 %v191
  %v367 = vunpack.c.h.b16 %v191
  %v368 = vunpack.c.l.b16 %v192
  %v369 = vunpack.c.h.b16 %v192
  %v370 = vunpack.c.l.b16 %v193
  %v371 = vunpack.c.h.b16 %v193
  %v372 = vunpack.c.l.b16 %v194
  %v373 = vunpack.c.h.b16 %v194
  %v374 = vunpack.c.l.b16 %v195
  %v375 = vunpack.c.h.b16 %v195
  %v376 = vunpack.c.l.b16 %v196
  %v377 = vunpack.c.h.b16 %v196
  %v378 = vunpack.c.l.b16 %v197
  %v379 = vunpack.c.h.b16 %v197
  %v380 = vunpack.c.l.b16 %v198
  %v381 = vunpack.c.h.b16 %v198
  %v382 = vunpack.c.l.b16 %v199
  %v383 = vunpack.c.h.b16 %v199
  %v384 = vunpack.c.l.b16 %v200
  %v385 = vunpack.c.h.b16 %v200
  %v386 = vunpack.c.l.b16 %v201
  %v387 = vunpack.c.h.b16 %v201
  %v388 = vunpack.c.l.b16 %v202
  %v389 = vunpack.c.h.b16 %v202
  %v390 = vunpack.c.l.b16 %v203
  %v391 = vunpack.c.h.b16 %v203
  %v392 = vunpack.c.l.b16 %v204
  %v393 = vunpack.c.h.b16 %v204
  %v394 = vunpack.c.l.b16 %v205
  %v395 = vunpack.c.h.b16 %v205
  %v396 = vunpack.c.l.b16 %v206
  %v397 = vunpack.c.h.b16 %v206
  %v398 = vunpack.c.l.b16 %v207
  %v399 = vunpack.c.h.b16 %v207
  %v400 = vunpack.c.l.b16 %v208
  %v401 = vunpack.c.h.b16 %v208
  %v402 = vunpack.c.l.b16 %v209
  %v403 = vunpack.c.h.b16 %v209
  %v404 = vunpack.c.l.b16 %v210
  %v405 = vunpack.c.h.b16 %v210
  %v406 = vunpack.c.l.b16 %v211
  %v407 = vunpack.c.h.b16 %v211
  %v408 = vunpack.c.l.b16 %v212
  %v409 = vunpack.c.h.b16 %v212
  %v410 = vunpack.c.l.b16 %v213
  %v411 = vunpack.c.h.b16 %v213
  %v412 = vunpack.c.l.b16 %v214
  %v413 = vunpack.c.h.b16 %v214
  %v414 = vunpack.c.l.b16 %v215
  %v415 = vunpack.c.h.b16 %v215
  %v416 = vunpack.c.l.b16 %v216
  %v417 = vunpack.c.h.b16 %v216
  %v418 = vunpack.c.l.b16 %v217
  %v419 = vunpack.c.h.b16 %v217
  %v420 = vunpack.c.l.b16 %v218
  %v421 = vunpack.c.h.b16 %v218
  %v422 = vunpack.c.l.b16 %v219
  %v423 = vunpack.c.h.b16 %v219
  %v424 = vunpack.c.l.b16 %v220
  %v425 = vunpack.c.h.b16 %v220
  %v426 = vunpack.c.l.b16 %v221
  %v427 = vunpack.c.h.b16 %v221
  %v428 = vunpack.c.l.b16 %v222
  %v429 = vunpack.c.h.b16 %v222
  %v430 = vunpack.c.l.b16 %v223
  %v431 = vunpack.c.h.b16 %v223
  %v432 = vunpack.c.l.b16 %v224
  %v433 = vunpack.c.h.b16 %v224
  %v434 = vunpack.c.l.b16 %v225
  %v435 = vunpack.c.h.b16 %v225
  %v436 = vunpack.c.l.b16 %v226
  %v437 = vunpack.c.h.b16 %v226
  %v438 = vunpack.c.l.b16 %v227
  %v439 = vunpack.c.h.b16 %v227
  %v440 = vunpack.c.l.b16 %v228
  %v441 = vunpack.c.h.b16 %v228
  %v442 = vunpack.c.l.b16 %v229
  %v443 = vunpack.c.h.b16 %v229
  %v444 = vpack.c.b16 %v320, %v316
  %v445 = vpack.c.b16 %v321, %v317
  %v446 = vpack.c.b16 %v322, %v318
  %v447 = vpack.c.b16 %v323, %v319
  %v448 = vpack.c.b16 %v328, %v324
  %v449 = vpack.c.b16 %v329, %v325
  %v450 = vpack.c.b16 %v330, %v326
  %v451 = vpack.c.b16 %v331, %v327
  %v452 = vpack.c.b16 %v336, %v332
  %v453 = vpack.c.b16 %v337, %v333
  %v454 = vpack.c.b16 %v338, %v334
  %v455 = vpack.c.b16 %v339, %v335
  %v456 = vpack.c.b16 %v344, %v340
  %v457 = vpack.c.b16 %v345, %v341
  %v458 = vpack.c.b16 %v346, %v342
  %v459 = vpack.c.b16 %v347, %v343
  %v460 = vpack.c.b16 %v352, %v348
  %v461 = vpack.c.b16 %v353, %v349
  %v462 = vpack.c.b16 %v354, %v350
  %v463 = vpack.c.b16 %v355, %v351
  %v464 = vpack.c.b16 %v360, %v356
  %v465 = vpack.c.b16 %v361, %v357
  %v466 = vpack.c.b16 %v362, %v358
  %v467 = vpack.c.b16 %v363, %v359
  %v468 = vpack.c.b16 %v368, %v364
  %v469 = vpack.c.b16 %v369, %v365
  %v470 = vpack.c.b16 %v370, %v366
  %v471 = vpack.c.b16 %v371, %v367
  %v472 = vpack.c.b16 %v376, %v372
  %v473 = vpack.c.b16 %v377, %v373
  %v474 = vpack.c.b16 %v378, %v374
  %v475 = vpack.c.b16 %v379, %v375
  %v476 = vpack.c.b16 %v384, %v380
  %v477 = vpack.c.b16 %v385, %v381
  %v478 = vpack.c.b16 %v386, %v382
  %v479 = vpack.c.b16 %v387, %v383
  %v480 = vpack.c.b16 %v392, %v388
  %v481 = vpack.c.b16 %v393, %v389
  %v482 = vpack.c.b16 %v394, %v390
  %v483 = vpack.c.b16 %v395, %v391
  %v484 = vpack.c.b16 %v400, %v396
  %v485 = vpack.c.b16 %v401, %v397
  %v486 = vpack.c.b16 %v402, %v398
  %v487 = vpack.c.b16 %v403, %v399
  %v488 = vpack.c.b16 %v408, %v404
  %v489 = vpack.c.b16 %v409, %v405
  %v490 = vpack.c.b16 %v410, %v406
  %v491 = vpack.c.b16 %v411, %v407
  %v492 = vpack.c.b16 %v416, %v412
  %v493 = vpack.c.b16 %v417, %v413
  %v494 = vpack.c.b16 %v418, %v414
  %v495 = vpack.c.b16 %v419, %v415
  %v496 = vpack.c.b16 %v424, %v420
  %v497 = vpack.c.b16 %v425, %v421
  %v498 = vpack.c.b16 %v426, %v422
  %v499 = vpack.c.b16 %v427, %v423
  %v500 = vpack.c.b16 %v432, %v428
  %v501 = vpack.c.b16 %v433, %v429
  %v502 = vpack.c.b16 %v434, %v430
  %v503 = vpack.c.b16 %v435, %v431
  %v504 = vpack.c.b16 %v440, %v436
  %v505 = vpack.c.b16 %v441, %v437
  %v506 = vpack.c.b16 %v442, %v438
  %v507 = vpack.c.b16 %v443, %v439
  %572 = vmatprep.subr.bf16.mxu0 %v445
  %573 = vmatpush1.bf16.msra.mxu0 %v444
  %574 = vmatprep.subr.bf16.mxu0 %v449
  %575 = vmatpush1.bf16.msra.mxu0 %v448
  %576 = vmatprep.subr.bf16.mxu0 %v453
  %577 = vmatpush1.bf16.msra.mxu0 %v452
  %578 = vmatprep.subr.bf16.mxu0 %v457
  %579 = vmatpush1.bf16.msra.mxu0 %v456
  %580 = vmatprep.subr.bf16.mxu0 %v461
  %581 = vmatpush1.bf16.msra.mxu0 %v460
  %582 = vmatprep.subr.bf16.mxu0 %v465
  %583 = vmatpush1.bf16.msra.mxu0 %v464
  %584 = vmatprep.subr.bf16.mxu0 %v469
  %585 = vmatpush1.bf16.msra.mxu0 %v468
  %586 = vmatprep.subr.bf16.mxu0 %v473
  %587 = vmatpush1.bf16.msra.mxu0 %v472
  %588 = vmatprep.subr.bf16.mxu0 %v477
  %589 = vmatpush1.bf16.msra.mxu0 %v476
  %590 = vmatprep.subr.bf16.mxu0 %v481
  %591 = vmatpush1.bf16.msra.mxu0 %v480
  %592 = vmatprep.subr.bf16.mxu0 %v485
  %593 = vmatpush1.bf16.msra.mxu0 %v484
  %594 = vmatprep.subr.bf16.mxu0 %v489
  %595 = vmatpush1.bf16.msra.mxu0 %v488
  %596 = vmatprep.subr.bf16.mxu0 %v493
  %597 = vmatpush1.bf16.msra.mxu0 %v492
  %598 = vmatprep.subr.bf16.mxu0 %v497
  %599 = vmatpush1.bf16.msra.mxu0 %v496
  %600 = vmatprep.subr.bf16.mxu0 %v501
  %601 = vmatpush1.bf16.msra.mxu0 %v500
  %602 = vmatprep.subr.bf16.mxu0 %v505
  %603 = vmatpush1.bf16.msra.mxu0 %v504
  %604 = vmatprep.mubr.bf16.mxu0 %v165
  %605 = vmatmul.mubr.bf16.gmra.mrb[0].mxu0 %v164
  %v606 = vpop.f32.mrb[0].mxu0
  %v607 = vadd.f32 %v235, %v606
  %v608 = vpop.f32.mrb[0].mxu0
  %v609 = vadd.f32 %v239, %v608
  %v610 = vpop.f32.mrb[0].mxu0
  %v611 = vpop.f32.mrb[0].mxu0
  %612 = vdwg.mxu0
  %613 = vmatprep.subr.bf16.mxu0 %v447
  %614 = vmatpush1.bf16.msra.mxu0 %v446
  %615 = vmatprep.subr.bf16.mxu0 %v451
  %616 = vmatpush1.bf16.msra.mxu0 %v450
  %617 = vmatprep.subr.bf16.mxu0 %v455
  %618 = vmatpush1.bf16.msra.mxu0 %v454
  %619 = vmatprep.subr.bf16.mxu0 %v459
  %620 = vmatpush1.bf16.msra.mxu0 %v458
  %621 = vmatprep.subr.bf16.mxu0 %v463
  %622 = vmatpush1.bf16.msra.mxu0 %v462
  %623 = vmatprep.subr.bf16.mxu0 %v467
  %624 = vmatpush1.bf16.msra.mxu0 %v466
  %625 = vmatprep.subr.bf16.mxu0 %v471
  %626 = vmatpush1.bf16.msra.mxu0 %v470
  %627 = vmatprep.subr.bf16.mxu0 %v475
  %628 = vmatpush1.bf16.msra.mxu0 %v474
  %629 = vmatprep.subr.bf16.mxu0 %v479
  %630 = vmatpush1.bf16.msra.mxu0 %v478
  %631 = vmatprep.subr.bf16.mxu0 %v483
  %632 = vmatpush1.bf16.msra.mxu0 %v482
  %633 = vmatprep.subr.bf16.mxu0 %v487
  %634 = vmatpush1.bf16.msra.mxu0 %v486
  %635 = vmatprep.subr.bf16.mxu0 %v491
  %636 = vmatpush1.bf16.msra.mxu0 %v490
  %637 = vmatprep.subr.bf16.mxu0 %v495
  %638 = vmatpush1.bf16.msra.mxu0 %v494
  %639 = vmatprep.subr.bf16.mxu0 %v499
  %640 = vmatpush1.bf16.msra.mxu0 %v498
  %641 = vmatprep.subr.bf16.mxu0 %v503
  %642 = vmatpush1.bf16.msra.mxu0 %v502
  %643 = vmatprep.subr.bf16.mxu0 %v507
  %644 = vmatpush1.bf16.msra.mxu0 %v506
  %645 = vmatprep.mubr.bf16.mxu0 %v165
  %646 = vmatmul.mubr.bf16.gmra.mrb[0].mxu0 %v164
  %v647 = vpop.f32.mrb[0].mxu0
  %v648 = vadd.f32 %v243, %v647
  %v649 = vpop.f32.mrb[0].mxu0
  %v650 = vadd.f32 %v247, %v649
  %v651 = vpop.f32.mrb[0].mxu0
  %v652 = vpop.f32.mrb[0].mxu0
  %653 = vdwg.mxu0
  %v654 = vmax.f32 %v607, 0.0
  %v655 = vmax.f32 %v609, 0.0
  %v656 = vmax.f32 %v648, 0.0
  %v657 = vmax.f32 %v650, 0.0
  %v658 = vpack.c.bf16 %v654, %v654
  %v659 = vpack.c.bf16 %v655, %v655
  %v660 = vpack.c.bf16 %v656, %v656
  %v661 = vpack.c.bf16 %v657, %v657
  %v662 = vld [vmem:[%s7] sm:$0xff]
  %v663 = vld [vmem:[%s7 + $0x8] sm:$0xff]
  %v664 = vld [vmem:[%s7 + $0x10] sm:$0xff]
  %v665 = vld [vmem:[%s7 + $0x18] sm:$0xf]
  %v666 = vld [vmem:[%s7 + $0x1c] sm:$0xff]
  %v667 = vld [vmem:[%s7 + $0x24] sm:$0xff]
  %v668 = vld [vmem:[%s7 + $0x2c] sm:$0xff]
  %v669 = vld [vmem:[%s7 + $0x34] sm:$0xf]
  %v670 = vld [vmem:[%s7 + $0x38] sm:$0xff]
  %v671 = vld [vmem:[%s7 + $0x40] sm:$0xff]
  %v672 = vld [vmem:[%s7 + $0x48] sm:$0xff]
  %v673 = vld [vmem:[%s7 + $0x50] sm:$0xf]
  %v674 = vld [vmem:[%s7 + $0x54] sm:$0xff]
  %v675 = vld [vmem:[%s7 + $0x5c] sm:$0xff]
  %v676 = vld [vmem:[%s7 + $0x64] sm:$0xff]
  %v677 = vld [vmem:[%s7 + $0x6c] sm:$0xf]
  %v678 = vld [vmem:[%s7 + $0x70] sm:$0xff]
  %v679 = vld [vmem:[%s7 + $0x78] sm:$0xff]
  %v680 = vld [vmem:[%s7 + $0x80] sm:$0xff]
  %v681 = vld [vmem:[%s7 + $0x88] sm:$0xf]
  %v682 = vld [vmem:[%s7 + $0x8c] sm:$0xff]
  %v683 = vld [vmem:[%s7 + $0x94] sm:$0xff]
  %v684 = vld [vmem:[%s7 + $0x9c] sm:$0xff]
  %v685 = vld [vmem:[%s7 + $0xa4] sm:$0xf]
  %v686 = vld [vmem:[%s7 + $0xa8] sm:$0xff]
  %v687 = vld [vmem:[%s7 + $0xb0] sm:$0xff]
  %v688 = vld [vmem:[%s7 + $0xb8] sm:$0xff]
  %v689 = vld [vmem:[%s7 + $0xc0] sm:$0xf]
  %v690 = vld [vmem:[%s7 + $0xc4] sm:$0xff]
  %v691 = vld [vmem:[%s7 + $0xcc] sm:$0xff]
  %v692 = vld [vmem:[%s7 + $0xd4] sm:$0xff]
  %v693 = vld [vmem:[%s7 + $0xdc] sm:$0xf]
  %v694 = vld [vmem:[%s7 + $0xe0] sm:$0xff]
  %v695 = vld [vmem:[%s7 + $0xe8] sm:$0xff]
  %v696 = vld [vmem:[%s7 + $0xf0] sm:$0xff]
  %v697 = vld [vmem:[%s7 + $0xf8] sm:$0xf]
  %v698 = vld [vmem:[%s7 + $0xfc] sm:$0xff]
  %v699 = vld [vmem:[%s7 + $0x104] sm:$0xff]
  %v700 = vld [vmem:[%s7 + $0x10c] sm:$0xff]
  %v701 = vld [vmem:[%s7 + $0x114] sm:$0xf]
  %v702 = vld [vmem:[%s7 + $0x118] sm:$0xff]
  %v703 = vld [vmem:[%s7 + $0x120] sm:$0xff]
  %v704 = vld [vmem:[%s7 + $0x128] sm:$0xff]
  %v705 = vld [vmem:[%s7 + $0x130] sm:$0xf]
  %v706 = vld [vmem:[%s7 + $0x134] sm:$0xff]
  %v707 = vld [vmem:[%s7 + $0x13c] sm:$0xff]
  %v708 = vld [vmem:[%s7 + $0x144] sm:$0xff]
  %v709 = vld [vmem:[%s7 + $0x14c] sm:$0xf]
  %v710 = vld [vmem:[%s7 + $0x150] sm:$0xff]
  %v711 = vld [vmem:[%s7 + $0x158] sm:$0xff]
  %v712 = vld [vmem:[%s7 + $0x160] sm:$0xff]
  %v713 = vld [vmem:[%s7 + $0x168] sm:$0xf]
  %v714 = vld [vmem:[%s7 + $0x16c] sm:$0xff]
  %v715 = vld [vmem:[%s7 + $0x174] sm:$0xff]
  %v716 = vld [vmem:[%s7 + $0x17c] sm:$0xff]
  %v717 = vld [vmem:[%s7 + $0x184] sm:$0xf]
  %v718 = vld [vmem:[%s7 + $0x188] sm:$0xff]
  %v719 = vld [vmem:[%s7 + $0x190] sm:$0xff]
  %v720 = vld [vmem:[%s7 + $0x198] sm:$0xff]
  %v721 = vld [vmem:[%s7 + $0x1a0] sm:$0xf]
  %v722 = vld [vmem:[%s7 + $0x1a4] sm:$0xff]
  %v723 = vld [vmem:[%s7 + $0x1ac] sm:$0xff]
  %v724 = vld [vmem:[%s7 + $0x1b4] sm:$0xff]
  %v725 = vld [vmem:[%s7 + $0x1bc] sm:$0xf]
  %v726 = vld [vmem:[%s7 + $0x1c0] sm:$0xff]
  %v727 = vld [vmem:[%s7 + $0x1c8] sm:$0xff]
  %v728 = vld [vmem:[%s7 + $0x1d0] sm:$0xff]
  %v729 = vld [vmem:[%s7 + $0x1d8] sm:$0xf]
  %v730 = vld [vmem:[%s7 + $0x1dc] sm:$0xff]
  %v731 = vld [vmem:[%s7 + $0x1e4] sm:$0xff]
  %v732 = vld [vmem:[%s7 + $0x1ec] sm:$0xff]
  %v733 = vld [vmem:[%s7 + $0x1f4] sm:$0xf]
  %v734 = vld [vmem:[%s7 + $0x1f8] sm:$0xff]
  %v735 = vld [vmem:[%s7 + $0x200] sm:$0xff]
  %v736 = vld [vmem:[%s7 + $0x208] sm:$0xff]
  %v737 = vld [vmem:[%s7 + $0x210] sm:$0xf]
  %v738 = vld [vmem:[%s7 + $0x214] sm:$0xff]
  %v739 = vld [vmem:[%s7 + $0x21c] sm:$0xff]
  %v740 = vld [vmem:[%s7 + $0x224] sm:$0xff]
  %v741 = vld [vmem:[%s7 + $0x22c] sm:$0xf]
  %v742 = vld [vmem:[%s7 + $0x230] sm:$0xff]
  %v743 = vld [vmem:[%s7 + $0x238] sm:$0xff]
  %v744 = vld [vmem:[%s7 + $0x240] sm:$0xff]
  %v745 = vld [vmem:[%s7 + $0x248] sm:$0xf]
  %v746 = vld [vmem:[%s7 + $0x24c] sm:$0xff]
  %v747 = vld [vmem:[%s7 + $0x254] sm:$0xff]
  %v748 = vld [vmem:[%s7 + $0x25c] sm:$0xff]
  %v749 = vld [vmem:[%s7 + $0x264] sm:$0xf]
  %v750 = vld [vmem:[%s7 + $0x268] sm:$0xff]
  %v751 = vld [vmem:[%s7 + $0x270] sm:$0xff]
  %v752 = vld [vmem:[%s7 + $0x278] sm:$0xff]
  %v753 = vld [vmem:[%s7 + $0x280] sm:$0xf]
  %v754 = vld [vmem:[%s7 + $0x284] sm:$0xff]
  %v755 = vld [vmem:[%s7 + $0x28c] sm:$0xff]
  %v756 = vld [vmem:[%s7 + $0x294] sm:$0xff]
  %v757 = vld [vmem:[%s7 + $0x29c] sm:$0xf]
  %v758 = vld [vmem:[%s7 + $0x2a0] sm:$0xff]
  %v759 = vld [vmem:[%s7 + $0x2a8] sm:$0xff]
  %v760 = vld [vmem:[%s7 + $0x2b0] sm:$0xff]
  %v761 = vld [vmem:[%s7 + $0x2b8] sm:$0xf]
  %v762 = vld [vmem:[%s7 + $0x2bc] sm:$0xff]
  %v763 = vld [vmem:[%s7 + $0x2c4] sm:$0xff]
  %v764 = vld [vmem:[%s7 + $0x2cc] sm:$0xff]
  %v765 = vld [vmem:[%s7 + $0x2d4] sm:$0xf]
  %v766 = vld [vmem:[%s7 + $0x2d8] sm:$0xff]
  %v767 = vld [vmem:[%s7 + $0x2e0] sm:$0xff]
  %v768 = vld [vmem:[%s7 + $0x2e8] sm:$0xff]
  %v769 = vld [vmem:[%s7 + $0x2f0] sm:$0xf]
  %v770 = vld [vmem:[%s7 + $0x2f4] sm:$0xff]
  %v771 = vld [vmem:[%s7 + $0x2fc] sm:$0xff]
  %v772 = vld [vmem:[%s7 + $0x304] sm:$0xff]
  %v773 = vld [vmem:[%s7 + $0x30c] sm:$0xf]
  %v774 = vld [vmem:[%s7 + $0x310] sm:$0xff]
  %v775 = vld [vmem:[%s7 + $0x318] sm:$0xff]
  %v776 = vld [vmem:[%s7 + $0x320] sm:$0xff]
  %v777 = vld [vmem:[%s7 + $0x328] sm:$0xf]
  %v778 = vld [vmem:[%s7 + $0x32c] sm:$0xff]
  %v779 = vld [vmem:[%s7 + $0x334] sm:$0xff]
  %v780 = vld [vmem:[%s7 + $0x33c] sm:$0xff]
  %v781 = vld [vmem:[%s7 + $0x344] sm:$0xf]
  %v782 = vld [vmem:[%s7 + $0x348] sm:$0xff]
  %v783 = vld [vmem:[%s7 + $0x350] sm:$0xff]
  %v784 = vld [vmem:[%s7 + $0x358] sm:$0xff]
  %v785 = vld [vmem:[%s7 + $0x360] sm:$0xf]
  %v786 = vld [vmem:[%s7 + $0x364] sm:$0xff]
  %v787 = vld [vmem:[%s7 + $0x36c] sm:$0xff]
  %v788 = vld [vmem:[%s7 + $0x374] sm:$0xff]
  %v789 = vld [vmem:[%s7 + $0x37c] sm:$0xf]
  %v790 = vld [vmem:[%s7 + $0x380] sm:$0xff]
  %v791 = vld [vmem:[%s7 + $0x388] sm:$0xff]
  %v792 = vld [vmem:[%s7 + $0x390] sm:$0xff]
  %v793 = vld [vmem:[%s7 + $0x398] sm:$0xf]
  %v794 = vld [vmem:[%s7 + $0x39c] sm:$0xff]
  %v795 = vld [vmem:[%s7 + $0x3a4] sm:$0xff]
  %v796 = vld [vmem:[%s7 + $0x3ac] sm:$0xff]
  %v797 = vld [vmem:[%s7 + $0x3b4] sm:$0xf]
  %v798 = vld [vmem:[%s7 + $0x3b8] sm:$0xff]
  %v799 = vld [vmem:[%s7 + $0x3c0] sm:$0xff]
  %v800 = vld [vmem:[%s7 + $0x3c8] sm:$0xff]
  %v801 = vld [vmem:[%s7 + $0x3d0] sm:$0xf]
  %v802 = vld [vmem:[%s7 + $0x3d4] sm:$0xff]
  %v803 = vld [vmem:[%s7 + $0x3dc] sm:$0xff]
  %v804 = vld [vmem:[%s7 + $0x3e4] sm:$0xff]
  %v805 = vld [vmem:[%s7 + $0x3ec] sm:$0xf]
  %v806 = vld [vmem:[%s7 + $0x3f0] sm:$0xff]
  %v807 = vld [vmem:[%s7 + $0x3f8] sm:$0xff]
  %v808 = vld [vmem:[%s7 + $0x400] sm:$0xff]
  %v809 = vld [vmem:[%s7 + $0x408] sm:$0xf]
  %v810 = vld [vmem:[%s7 + $0x40c] sm:$0xff]
  %v811 = vld [vmem:[%s7 + $0x414] sm:$0xff]
  %v812 = vld [vmem:[%s7 + $0x41c] sm:$0xff]
  %v813 = vld [vmem:[%s7 + $0x424] sm:$0xf]
  %v814 = vld [vmem:[%s7 + $0x428] sm:$0xff]
  %v815 = vld [vmem:[%s7 + $0x430] sm:$0xff]
  %v816 = vld [vmem:[%s7 + $0x438] sm:$0xff]
  %v817 = vld [vmem:[%s7 + $0x440] sm:$0xf]
  %v818 = vld [vmem:[%s7 + $0x444] sm:$0xff]
  %v819 = vld [vmem:[%s7 + $0x44c] sm:$0xff]
  %v820 = vld [vmem:[%s7 + $0x454] sm:$0xff]
  %v821 = vld [vmem:[%s7 + $0x45c] sm:$0xf]
  %v822 = vld [vmem:[%s7 + $0x460] sm:$0xff]
  %v823 = vld [vmem:[%s7 + $0x468] sm:$0xff]
  %v824 = vld [vmem:[%s7 + $0x470] sm:$0xff]
  %v825 = vld [vmem:[%s7 + $0x478] sm:$0xf]
  %v826 = vld [vmem:[%s7 + $0x47c] sm:$0xff]
  %v827 = vld [vmem:[%s7 + $0x484] sm:$0xff]
  %v828 = vld [vmem:[%s7 + $0x48c] sm:$0xff]
  %v829 = vld [vmem:[%s7 + $0x494] sm:$0xf]
  %v830 = vld [vmem:[%s7 + $0x498] sm:$0xff]
  %v831 = vld [vmem:[%s7 + $0x4a0] sm:$0xff]
  %v832 = vld [vmem:[%s7 + $0x4a8] sm:$0xff]
  %v833 = vld [vmem:[%s7 + $0x4b0] sm:$0xf]
  %v834 = vld [vmem:[%s7 + $0x4b4] sm:$0xff]
  %v835 = vld [vmem:[%s7 + $0x4bc] sm:$0xff]
  %v836 = vld [vmem:[%s7 + $0x4c4] sm:$0xff]
  %v837 = vld [vmem:[%s7 + $0x4cc] sm:$0xf]
  %v838 = vld [vmem:[%s7 + $0x4d0] sm:$0xff]
  %v839 = vld [vmem:[%s7 + $0x4d8] sm:$0xff]
  %v840 = vld [vmem:[%s7 + $0x4e0] sm:$0xff]
  %v841 = vld [vmem:[%s7 + $0x4e8] sm:$0xf]
  %v842 = vld [vmem:[%s7 + $0x4ec] sm:$0xff]
  %v843 = vld [vmem:[%s7 + $0x4f4] sm:$0xff]
  %v844 = vld [vmem:[%s7 + $0x4fc] sm:$0xff]
  %v845 = vld [vmem:[%s7 + $0x504] sm:$0xf]
  %v846 = vld [vmem:[%s7 + $0x508] sm:$0xff]
  %v847 = vld [vmem:[%s7 + $0x510] sm:$0xff]
  %v848 = vld [vmem:[%s7 + $0x518] sm:$0xff]
  %v849 = vld [vmem:[%s7 + $0x520] sm:$0xf]
  %v850 = vld [vmem:[%s7 + $0x524] sm:$0xff]
  %v851 = vld [vmem:[%s7 + $0x52c] sm:$0xff]
  %v852 = vld [vmem:[%s7 + $0x534] sm:$0xff]
  %v853 = vld [vmem:[%s7 + $0x53c] sm:$0xf]
  %v854 = vld [vmem:[%s7 + $0x540] sm:$0xff]
  %v855 = vld [vmem:[%s7 + $0x548] sm:$0xff]
  %v856 = vld [vmem:[%s7 + $0x550] sm:$0xff]
  %v857 = vld [vmem:[%s7 + $0x558] sm:$0xf]
  %v858 = vld [vmem:[%s7 + $0x55c] sm:$0xff]
  %v859 = vld [vmem:[%s7 + $0x564] sm:$0xff]
  %v860 = vld [vmem:[%s7 + $0x56c] sm:$0xff]
  %v861 = vld [vmem:[%s7 + $0x574] sm:$0xf]
  %v862 = vld [vmem:[%s7 + $0x578] sm:$0xff]
  %v863 = vld [vmem:[%s7 + $0x580] sm:$0xff]
  %v864 = vld [vmem:[%s7 + $0x588] sm:$0xff]
  %v865 = vld [vmem:[%s7 + $0x590] sm:$0xf]
  %v866 = vld [vmem:[%s7 + $0x594] sm:$0xff]
  %v867 = vld [vmem:[%s7 + $0x59c] sm:$0xff]
  %v868 = vld [vmem:[%s7 + $0x5a4] sm:$0xff]
  %v869 = vld [vmem:[%s7 + $0x5ac] sm:$0xf]
  %v870 = vld [vmem:[%s7 + $0x5b0] sm:$0xff]
  %v871 = vld [vmem:[%s7 + $0x5b8] sm:$0xff]
  %v872 = vld [vmem:[%s7 + $0x5c0] sm:$0xff]
  %v873 = vld [vmem:[%s7 + $0x5c8] sm:$0xf]
  %v874 = vld [vmem:[%s7 + $0x5cc] sm:$0xff]
  %v875 = vld [vmem:[%s7 + $0x5d4] sm:$0xff]
  %v876 = vld [vmem:[%s7 + $0x5dc] sm:$0xff]
  %v877 = vld [vmem:[%s7 + $0x5e4] sm:$0xf]
  %v878 = vld [vmem:[%s7 + $0x5e8] sm:$0xff]
  %v879 = vld [vmem:[%s7 + $0x5f0] sm:$0xff]
  %v880 = vld [vmem:[%s7 + $0x5f8] sm:$0xff]
  %v881 = vld [vmem:[%s7 + $0x600] sm:$0xf]
  %v882 = vld [vmem:[%s7 + $0x604] sm:$0xff]
  %v883 = vld [vmem:[%s7 + $0x60c] sm:$0xff]
  %v884 = vld [vmem:[%s7 + $0x614] sm:$0xff]
  %v885 = vld [vmem:[%s7 + $0x61c] sm:$0xf]
  %v886 = vld [vmem:[%s7 + $0x620] sm:$0xff]
  %v887 = vld [vmem:[%s7 + $0x628] sm:$0xff]
  %v888 = vld [vmem:[%s7 + $0x630] sm:$0xff]
  %v889 = vld [vmem:[%s7 + $0x638] sm:$0xf]
  %v890 = vld [vmem:[%s7 + $0x63c] sm:$0xff]
  %v891 = vld [vmem:[%s7 + $0x644] sm:$0xff]
  %v892 = vld [vmem:[%s7 + $0x64c] sm:$0xff]
  %v893 = vld [vmem:[%s7 + $0x654] sm:$0xf]
  %v894 = vld [vmem:[%s7 + $0x658] sm:$0xff]
  %v895 = vld [vmem:[%s7 + $0x660] sm:$0xff]
  %v896 = vld [vmem:[%s7 + $0x668] sm:$0xff]
  %v897 = vld [vmem:[%s7 + $0x670] sm:$0xf]
  %v898 = vld [vmem:[%s7 + $0x674] sm:$0xff]
  %v899 = vld [vmem:[%s7 + $0x67c] sm:$0xff]
  %v900 = vld [vmem:[%s7 + $0x684] sm:$0xff]
  %v901 = vld [vmem:[%s7 + $0x68c] sm:$0xf]
  %v902 = vld [vmem:[%s7 + $0x690] sm:$0xff]
  %v903 = vld [vmem:[%s7 + $0x698] sm:$0xff]
  %v904 = vld [vmem:[%s7 + $0x6a0] sm:$0xff]
  %v905 = vld [vmem:[%s7 + $0x6a8] sm:$0xf]
  %v906 = vld [vmem:[%s7 + $0x6ac] sm:$0xff]
  %v907 = vld [vmem:[%s7 + $0x6b4] sm:$0xff]
  %v908 = vld [vmem:[%s7 + $0x6bc] sm:$0xff]
  %v909 = vld [vmem:[%s7 + $0x6c4] sm:$0xf]
  %v910 = vld [vmem:[%s7 + $0x6c8] sm:$0xff]
  %v911 = vld [vmem:[%s7 + $0x6d0] sm:$0xff]
  %v912 = vld [vmem:[%s7 + $0x6d8] sm:$0xff]
  %v913 = vld [vmem:[%s7 + $0x6e0] sm:$0xf]
  %v914 = vld [vmem:[%s7 + $0x6e4] sm:$0xff]
  %v915 = vld [vmem:[%s7 + $0x6ec] sm:$0xff]
  %v916 = vld [vmem:[%s7 + $0x6f4] sm:$0xff]
  %v917 = vld [vmem:[%s7 + $0x6fc] sm:$0xf]
  %v918 = vld [vmem:[%s8] sm:$0x7f]
  %v920 = vlaneseq
  %v921 = vshrl.u32 %v920, 7
  %v922 = vsub.s32 0, %v921
  %v923 = vrot.slane %v918, %v922
  %v924 = vlaneseq
  %v925 = vshrl.u32 %v924, 7
  %v926 = vsub.s32 1, %v925
  %v927 = vrot.slane %v918, %v926
  %v928 = vlaneseq
  %v929 = vshrl.u32 %v928, 7
  %v930 = vsub.s32 2, %v929
  %v931 = vrot.slane %v918, %v930
  %v932 = vlaneseq
  %v933 = vshrl.u32 %v932, 7
  %v934 = vsub.s32 3, %v933
  %v935 = vrot.slane %v918, %v934
  %v936 = vlaneseq
  %v937 = vshrl.u32 %v936, 7
  %v938 = vsub.s32 4, %v937
  %v939 = vrot.slane %v918, %v938
  %v940 = vlaneseq
  %v941 = vshrl.u32 %v940, 7
  %v942 = vsub.s32 5, %v941
  %v943 = vrot.slane %v918, %v942
  %v944 = vlaneseq
  %v945 = vshrl.u32 %v944, 7
  %v946 = vsub.s32 6, %v945
  %v947 = vrot.slane %v918, %v946
  %v1211 = vunpack.c.l.b16 %v662
  %v1212 = vunpack.c.h.b16 %v662
  %v1213 = vunpack.c.l.b16 %v663
  %v1214 = vunpack.c.h.b16 %v663
  %v1215 = vunpack.c.l.b16 %v664
  %v1216 = vunpack.c.h.b16 %v664
  %v1217 = vunpack.c.l.b16 %v665
  %v1218 = vunpack.c.l.b16 %v666
  %v1219 = vunpack.c.h.b16 %v666
  %v1220 = vunpack.c.l.b16 %v667
  %v1221 = vunpack.c.h.b16 %v667
  %v1222 = vunpack.c.l.b16 %v668
  %v1223 = vunpack.c.h.b16 %v668
  %v1224 = vunpack.c.l.b16 %v669
  %v1225 = vunpack.c.l.b16 %v670
  %v1226 = vunpack.c.h.b16 %v670
  %v1227 = vunpack.c.l.b16 %v671
  %v1228 = vunpack.c.h.b16 %v671
  %v1229 = vunpack.c.l.b16 %v672
  %v1230 = vunpack.c.h.b16 %v672
  %v1231 = vunpack.c.l.b16 %v673
  %v1232 = vunpack.c.l.b16 %v674
  %v1233 = vunpack.c.h.b16 %v674
  %v1234 = vunpack.c.l.b16 %v675
  %v1235 = vunpack.c.h.b16 %v675
  %v1236 = vunpack.c.l.b16 %v676
  %v1237 = vunpack.c.h.b16 %v676
  %v1238 = vunpack.c.l.b16 %v677
  %v1239 = vunpack.c.l.b16 %v678
  %v1240 = vunpack.c.h.b16 %v678
  %v1241 = vunpack.c.l.b16 %v679
  %v1242 = vunpack.c.h.b16 %v679
  %v1243 = vunpack.c.l.b16 %v680
  %v1244 = vunpack.c.h.b16 %v680
  %v1245 = vunpack.c.l.b16 %v681
  %v1246 = vunpack.c.l.b16 %v682
  %v1247 = vunpack.c.h.b16 %v682
  %v1248 = vunpack.c.l.b16 %v683
  %v1249 = vunpack.c.h.b16 %v683
  %v1250 = vunpack.c.l.b16 %v684
  %v1251 = vunpack.c.h.b16 %v684
  %v1252 = vunpack.c.l.b16 %v685
  %v1253 = vunpack.c.l.b16 %v686
  %v1254 = vunpack.c.h.b16 %v686
  %v1255 = vunpack.c.l.b16 %v687
  %v1256 = vunpack.c.h.b16 %v687
  %v1257 = vunpack.c.l.b16 %v688
  %v1258 = vunpack.c.h.b16 %v688
  %v1259 = vunpack.c.l.b16 %v689
  %v1260 = vunpack.c.l.b16 %v690
  %v1261 = vunpack.c.h.b16 %v690
  %v1262 = vunpack.c.l.b16 %v691
  %v1263 = vunpack.c.h.b16 %v691
  %v1264 = vunpack.c.l.b16 %v692
  %v1265 = vunpack.c.h.b16 %v692
  %v1266 = vunpack.c.l.b16 %v693
  %v1267 = vunpack.c.l.b16 %v694
  %v1268 = vunpack.c.h.b16 %v694
  %v1269 = vunpack.c.l.b16 %v695
  %v1270 = vunpack.c.h.b16 %v695
  %v1271 = vunpack.c.l.b16 %v696
  %v1272 = vunpack.c.h.b16 %v696
  %v1273 = vunpack.c.l.b16 %v697
  %v1274 = vunpack.c.l.b16 %v698
  %v1275 = vunpack.c.h.b16 %v698
  %v1276 = vunpack.c.l.b16 %v699
  %v1277 = vunpack.c.h.b16 %v699
  %v1278 = vunpack.c.l.b16 %v700
  %v1279 = vunpack.c.h.b16 %v700
  %v1280 = vunpack.c.l.b16 %v701
  %v1281 = vunpack.c.l.b16 %v702
  %v1282 = vunpack.c.h.b16 %v702
  %v1283 = vunpack.c.l.b16 %v703
  %v1284 = vunpack.c.h.b16 %v703
  %v1285 = vunpack.c.l.b16 %v704
  %v1286 = vunpack.c.h.b16 %v704
  %v1287 = vunpack.c.l.b16 %v705
  %v1288 = vunpack.c.l.b16 %v706
  %v1289 = vunpack.c.h.b16 %v706
  %v1290 = vunpack.c.l.b16 %v707
  %v1291 = vunpack.c.h.b16 %v707
  %v1292 = vunpack.c.l.b16 %v708
  %v1293 = vunpack.c.h.b16 %v708
  %v1294 = vunpack.c.l.b16 %v709
  %v1295 = vunpack.c.l.b16 %v710
  %v1296 = vunpack.c.h.b16 %v710
  %v1297 = vunpack.c.l.b16 %v711
  %v1298 = vunpack.c.h.b16 %v711
  %v1299 = vunpack.c.l.b16 %v712
  %v1300 = vunpack.c.h.b16 %v712
  %v1301 = vunpack.c.l.b16 %v713
  %v1302 = vunpack.c.l.b16 %v714
  %v1303 = vunpack.c.h.b16 %v714
  %v1304 = vunpack.c.l.b16 %v715
  %v1305 = vunpack.c.h.b16 %v715
  %v1306 = vunpack.c.l.b16 %v716
  %v1307 = vunpack.c.h.b16 %v716
  %v1308 = vunpack.c.l.b16 %v717
  %v1309 = vunpack.c.l.b16 %v718
  %v1310 = vunpack.c.h.b16 %v718
  %v1311 = vunpack.c.l.b16 %v719
  %v1312 = vunpack.c.h.b16 %v719
  %v1313 = vunpack.c.l.b16 %v720
  %v1314 = vunpack.c.h.b16 %v720
  %v1315 = vunpack.c.l.b16 %v721
  %v1316 = vunpack.c.l.b16 %v722
  %v1317 = vunpack.c.h.b16 %v722
  %v1318 = vunpack.c.l.b16 %v723
  %v1319 = vunpack.c.h.b16 %v723
  %v1320 = vunpack.c.l.b16 %v724
  %v1321 = vunpack.c.h.b16 %v724
  %v1322 = vunpack.c.l.b16 %v725
  %v1323 = vunpack.c.l.b16 %v726
  %v1324 = vunpack.c.h.b16 %v726
  %v1325 = vunpack.c.l.b16 %v727
  %v1326 = vunpack.c.h.b16 %v727
  %v1327 = vunpack.c.l.b16 %v728
  %v1328 = vunpack.c.h.b16 %v728
  %v1329 = vunpack.c.l.b16 %v729
  %v1330 = vunpack.c.l.b16 %v730
  %v1331 = vunpack.c.h.b16 %v730
  %v1332 = vunpack.c.l.b16 %v731
  %v1333 = vunpack.c.h.b16 %v731
  %v1334 = vunpack.c.l.b16 %v732
  %v1335 = vunpack.c.h.b16 %v732
  %v1336 = vunpack.c.l.b16 %v733
  %v1337 = vunpack.c.l.b16 %v734
  %v1338 = vunpack.c.h.b16 %v734
  %v1339 = vunpack.c.l.b16 %v735
  %v1340 = vunpack.c.h.b16 %v735
  %v1341 = vunpack.c.l.b16 %v736
  %v1342 = vunpack.c.h.b16 %v736
  %v1343 = vunpack.c.l.b16 %v737
  %v1344 = vunpack.c.l.b16 %v738
  %v1345 = vunpack.c.h.b16 %v738
  %v1346 = vunpack.c.l.b16 %v739
  %v1347 = vunpack.c.h.b16 %v739
  %v1348 = vunpack.c.l.b16 %v740
  %v1349 = vunpack.c.h.b16 %v740
  %v1350 = vunpack.c.l.b16 %v741
  %v1351 = vunpack.c.l.b16 %v742
  %v1352 = vunpack.c.h.b16 %v742
  %v1353 = vunpack.c.l.b16 %v743
  %v1354 = vunpack.c.h.b16 %v743
  %v1355 = vunpack.c.l.b16 %v744
  %v1356 = vunpack.c.h.b16 %v744
  %v1357 = vunpack.c.l.b16 %v745
  %v1358 = vunpack.c.l.b16 %v746
  %v1359 = vunpack.c.h.b16 %v746
  %v1360 = vunpack.c.l.b16 %v747
  %v1361 = vunpack.c.h.b16 %v747
  %v1362 = vunpack.c.l.b16 %v748
  %v1363 = vunpack.c.h.b16 %v748
  %v1364 = vunpack.c.l.b16 %v749
  %v1365 = vunpack.c.l.b16 %v750
  %v1366 = vunpack.c.h.b16 %v750
  %v1367 = vunpack.c.l.b16 %v751
  %v1368 = vunpack.c.h.b16 %v751
  %v1369 = vunpack.c.l.b16 %v752
  %v1370 = vunpack.c.h.b16 %v752
  %v1371 = vunpack.c.l.b16 %v753
  %v1372 = vunpack.c.l.b16 %v754
  %v1373 = vunpack.c.h.b16 %v754
  %v1374 = vunpack.c.l.b16 %v755
  %v1375 = vunpack.c.h.b16 %v755
  %v1376 = vunpack.c.l.b16 %v756
  %v1377 = vunpack.c.h.b16 %v756
  %v1378 = vunpack.c.l.b16 %v757
  %v1379 = vunpack.c.l.b16 %v758
  %v1380 = vunpack.c.h.b16 %v758
  %v1381 = vunpack.c.l.b16 %v759
  %v1382 = vunpack.c.h.b16 %v759
  %v1383 = vunpack.c.l.b16 %v760
  %v1384 = vunpack.c.h.b16 %v760
  %v1385 = vunpack.c.l.b16 %v761
  %v1386 = vunpack.c.l.b16 %v762
  %v1387 = vunpack.c.h.b16 %v762
  %v1388 = vunpack.c.l.b16 %v763
  %v1389 = vunpack.c.h.b16 %v763
  %v1390 = vunpack.c.l.b16 %v764
  %v1391 = vunpack.c.h.b16 %v764
  %v1392 = vunpack.c.l.b16 %v765
  %v1393 = vunpack.c.l.b16 %v766
  %v1394 = vunpack.c.h.b16 %v766
  %v1395 = vunpack.c.l.b16 %v767
  %v1396 = vunpack.c.h.b16 %v767
  %v1397 = vunpack.c.l.b16 %v768
  %v1398 = vunpack.c.h.b16 %v768
  %v1399 = vunpack.c.l.b16 %v769
  %v1400 = vunpack.c.l.b16 %v770
  %v1401 = vunpack.c.h.b16 %v770
  %v1402 = vunpack.c.l.b16 %v771
  %v1403 = vunpack.c.h.b16 %v771
  %v1404 = vunpack.c.l.b16 %v772
  %v1405 = vunpack.c.h.b16 %v772
  %v1406 = vunpack.c.l.b16 %v773
  %v1407 = vunpack.c.l.b16 %v774
  %v1408 = vunpack.c.h.b16 %v774
  %v1409 = vunpack.c.l.b16 %v775
  %v1410 = vunpack.c.h.b16 %v775
  %v1411 = vunpack.c.l.b16 %v776
  %v1412 = vunpack.c.h.b16 %v776
  %v1413 = vunpack.c.l.b16 %v777
  %v1414 = vunpack.c.l.b16 %v778
  %v1415 = vunpack.c.h.b16 %v778
  %v1416 = vunpack.c.l.b16 %v779
  %v1417 = vunpack.c.h.b16 %v779
  %v1418 = vunpack.c.l.b16 %v780
  %v1419 = vunpack.c.h.b16 %v780
  %v1420 = vunpack.c.l.b16 %v781
  %v1421 = vunpack.c.l.b16 %v782
  %v1422 = vunpack.c.h.b16 %v782
  %v1423 = vunpack.c.l.b16 %v783
  %v1424 = vunpack.c.h.b16 %v783
  %v1425 = vunpack.c.l.b16 %v784
  %v1426 = vunpack.c.h.b16 %v784
  %v1427 = vunpack.c.l.b16 %v785
  %v1428 = vunpack.c.l.b16 %v786
  %v1429 = vunpack.c.h.b16 %v786
  %v1430 = vunpack.c.l.b16 %v787
  %v1431 = vunpack.c.h.b16 %v787
  %v1432 = vunpack.c.l.b16 %v788
  %v1433 = vunpack.c.h.b16 %v788
  %v1434 = vunpack.c.l.b16 %v789
  %v1435 = vunpack.c.l.b16 %v790
  %v1436 = vunpack.c.h.b16 %v790
  %v1437 = vunpack.c.l.b16 %v791
  %v1438 = vunpack.c.h.b16 %v791
  %v1439 = vunpack.c.l.b16 %v792
  %v1440 = vunpack.c.h.b16 %v792
  %v1441 = vunpack.c.l.b16 %v793
  %v1442 = vunpack.c.l.b16 %v794
  %v1443 = vunpack.c.h.b16 %v794
  %v1444 = vunpack.c.l.b16 %v795
  %v1445 = vunpack.c.h.b16 %v795
  %v1446 = vunpack.c.l.b16 %v796
  %v1447 = vunpack.c.h.b16 %v796
  %v1448 = vunpack.c.l.b16 %v797
  %v1449 = vunpack.c.l.b16 %v798
  %v1450 = vunpack.c.h.b16 %v798
  %v1451 = vunpack.c.l.b16 %v799
  %v1452 = vunpack.c.h.b16 %v799
  %v1453 = vunpack.c.l.b16 %v800
  %v1454 = vunpack.c.h.b16 %v800
  %v1455 = vunpack.c.l.b16 %v801
  %v1456 = vunpack.c.l.b16 %v802
  %v1457 = vunpack.c.h.b16 %v802
  %v1458 = vunpack.c.l.b16 %v803
  %v1459 = vunpack.c.h.b16 %v803
  %v1460 = vunpack.c.l.b16 %v804
  %v1461 = vunpack.c.h.b16 %v804
  %v1462 = vunpack.c.l.b16 %v805
  %v1463 = vunpack.c.l.b16 %v806
  %v1464 = vunpack.c.h.b16 %v806
  %v1465 = vunpack.c.l.b16 %v807
  %v1466 = vunpack.c.h.b16 %v807
  %v1467 = vunpack.c.l.b16 %v808
  %v1468 = vunpack.c.h.b16 %v808
  %v1469 = vunpack.c.l.b16 %v809
  %v1470 = vunpack.c.l.b16 %v810
  %v1471 = vunpack.c.h.b16 %v810
  %v1472 = vunpack.c.l.b16 %v811
  %v1473 = vunpack.c.h.b16 %v811
  %v1474 = vunpack.c.l.b16 %v812
  %v1475 = vunpack.c.h.b16 %v812
  %v1476 = vunpack.c.l.b16 %v813
  %v1477 = vunpack.c.l.b16 %v814
  %v1478 = vunpack.c.h.b16 %v814
  %v1479 = vunpack.c.l.b16 %v815
  %v1480 = vunpack.c.h.b16 %v815
  %v1481 = vunpack.c.l.b16 %v816
  %v1482 = vunpack.c.h.b16 %v816
  %v1483 = vunpack.c.l.b16 %v817
  %v1484 = vunpack.c.l.b16 %v818
  %v1485 = vunpack.c.h.b16 %v818
  %v1486 = vunpack.c.l.b16 %v819
  %v1487 = vunpack.c.h.b16 %v819
  %v1488 = vunpack.c.l.b16 %v820
  %v1489 = vunpack.c.h.b16 %v820
  %v1490 = vunpack.c.l.b16 %v821
  %v1491 = vunpack.c.l.b16 %v822
  %v1492 = vunpack.c.h.b16 %v822
  %v1493 = vunpack.c.l.b16 %v823
  %v1494 = vunpack.c.h.b16 %v823
  %v1495 = vunpack.c.l.b16 %v824
  %v1496 = vunpack.c.h.b16 %v824
  %v1497 = vunpack.c.l.b16 %v825
  %v1498 = vunpack.c.l.b16 %v826
  %v1499 = vunpack.c.h.b16 %v826
  %v1500 = vunpack.c.l.b16 %v827
  %v1501 = vunpack.c.h.b16 %v827
  %v1502 = vunpack.c.l.b16 %v828
  %v1503 = vunpack.c.h.b16 %v828
  %v1504 = vunpack.c.l.b16 %v829
  %v1505 = vunpack.c.l.b16 %v830
  %v1506 = vunpack.c.h.b16 %v830
  %v1507 = vunpack.c.l.b16 %v831
  %v1508 = vunpack.c.h.b16 %v831
  %v1509 = vunpack.c.l.b16 %v832
  %v1510 = vunpack.c.h.b16 %v832
  %v1511 = vunpack.c.l.b16 %v833
  %v1512 = vunpack.c.l.b16 %v834
  %v1513 = vunpack.c.h.b16 %v834
  %v1514 = vunpack.c.l.b16 %v835
  %v1515 = vunpack.c.h.b16 %v835
  %v1516 = vunpack.c.l.b16 %v836
  %v1517 = vunpack.c.h.b16 %v836
  %v1518 = vunpack.c.l.b16 %v837
  %v1519 = vunpack.c.l.b16 %v838
  %v1520 = vunpack.c.h.b16 %v838
  %v1521 = vunpack.c.l.b16 %v839
  %v1522 = vunpack.c.h.b16 %v839
  %v1523 = vunpack.c.l.b16 %v840
  %v1524 = vunpack.c.h.b16 %v840
  %v1525 = vunpack.c.l.b16 %v841
  %v1526 = vunpack.c.l.b16 %v842
  %v1527 = vunpack.c.h.b16 %v842
  %v1528 = vunpack.c.l.b16 %v843
  %v1529 = vunpack.c.h.b16 %v843
  %v1530 = vunpack.c.l.b16 %v844
  %v1531 = vunpack.c.h.b16 %v844
  %v1532 = vunpack.c.l.b16 %v845
  %v1533 = vunpack.c.l.b16 %v846
  %v1534 = vunpack.c.h.b16 %v846
  %v1535 = vunpack.c.l.b16 %v847
  %v1536 = vunpack.c.h.b16 %v847
  %v1537 = vunpack.c.l.b16 %v848
  %v1538 = vunpack.c.h.b16 %v848
  %v1539 = vunpack.c.l.b16 %v849
  %v1540 = vunpack.c.l.b16 %v850
  %v1541 = vunpack.c.h.b16 %v850
  %v1542 = vunpack.c.l.b16 %v851
  %v1543 = vunpack.c.h.b16 %v851
  %v1544 = vunpack.c.l.b16 %v852
  %v1545 = vunpack.c.h.b16 %v852
  %v1546 = vunpack.c.l.b16 %v853
  %v1547 = vunpack.c.l.b16 %v854
  %v1548 = vunpack.c.h.b16 %v854
  %v1549 = vunpack.c.l.b16 %v855
  %v1550 = vunpack.c.h.b16 %v855
  %v1551 = vunpack.c.l.b16 %v856
  %v1552 = vunpack.c.h.b16 %v856
  %v1553 = vunpack.c.l.b16 %v857
  %v1554 = vunpack.c.l.b16 %v858
  %v1555 = vunpack.c.h.b16 %v858
  %v1556 = vunpack.c.l.b16 %v859
  %v1557 = vunpack.c.h.b16 %v859
  %v1558 = vunpack.c.l.b16 %v860
  %v1559 = vunpack.c.h.b16 %v860
  %v1560 = vunpack.c.l.b16 %v861
  %v1561 = vunpack.c.l.b16 %v862
  %v1562 = vunpack.c.h.b16 %v862
  %v1563 = vunpack.c.l.b16 %v863
  %v1564 = vunpack.c.h.b16 %v863
  %v1565 = vunpack.c.l.b16 %v864
  %v1566 = vunpack.c.h.b16 %v864
  %v1567 = vunpack.c.l.b16 %v865
  %v1568 = vunpack.c.l.b16 %v866
  %v1569 = vunpack.c.h.b16 %v866
  %v1570 = vunpack.c.l.b16 %v867
  %v1571 = vunpack.c.h.b16 %v867
  %v1572 = vunpack.c.l.b16 %v868
  %v1573 = vunpack.c.h.b16 %v868
  %v1574 = vunpack.c.l.b16 %v869
  %v1575 = vunpack.c.l.b16 %v870
  %v1576 = vunpack.c.h.b16 %v870
  %v1577 = vunpack.c.l.b16 %v871
  %v1578 = vunpack.c.h.b16 %v871
  %v1579 = vunpack.c.l.b16 %v872
  %v1580 = vunpack.c.h.b16 %v872
  %v1581 = vunpack.c.l.b16 %v873
  %v1582 = vunpack.c.l.b16 %v874
  %v1583 = vunpack.c.h.b16 %v874
  %v1584 = vunpack.c.l.b16 %v875
  %v1585 = vunpack.c.h.b16 %v875
  %v1586 = vunpack.c.l.b16 %v876
  %v1587 = vunpack.c.h.b16 %v876
  %v1588 = vunpack.c.l.b16 %v877
  %v1589 = vunpack.c.l.b16 %v878
  %v1590 = vunpack.c.h.b16 %v878
  %v1591 = vunpack.c.l.b16 %v879
  %v1592 = vunpack.c.h.b16 %v879
  %v1593 = vunpack.c.l.b16 %v880
  %v1594 = vunpack.c.h.b16 %v880
  %v1595 = vunpack.c.l.b16 %v881
  %v1596 = vunpack.c.l.b16 %v882
  %v1597 = vunpack.c.h.b16 %v882
  %v1598 = vunpack.c.l.b16 %v883
  %v1599 = vunpack.c.h.b16 %v883
  %v1600 = vunpack.c.l.b16 %v884
  %v1601 = vunpack.c.h.b16 %v884
  %v1602 = vunpack.c.l.b16 %v885
  %v1603 = vunpack.c.l.b16 %v886
  %v1604 = vunpack.c.h.b16 %v886
  %v1605 = vunpack.c.l.b16 %v887
  %v1606 = vunpack.c.h.b16 %v887
  %v1607 = vunpack.c.l.b16 %v888
  %v1608 = vunpack.c.h.b16 %v888
  %v1609 = vunpack.c.l.b16 %v889
  %v1610 = vunpack.c.l.b16 %v890
  %v1611 = vunpack.c.h.b16 %v890
  %v1612 = vunpack.c.l.b16 %v891
  %v1613 = vunpack.c.h.b16 %v891
  %v1614 = vunpack.c.l.b16 %v892
  %v1615 = vunpack.c.h.b16 %v892
  %v1616 = vunpack.c.l.b16 %v893
  %v1617 = vunpack.c.l.b16 %v894
  %v1618 = vunpack.c.h.b16 %v894
  %v1619 = vunpack.c.l.b16 %v895
  %v1620 = vunpack.c.h.b16 %v895
  %v1621 = vunpack.c.l.b16 %v896
  %v1622 = vunpack.c.h.b16 %v896
  %v1623 = vunpack.c.l.b16 %v897
  %v1624 = vunpack.c.l.b16 %v898
  %v1625 = vunpack.c.h.b16 %v898
  %v1626 = vunpack.c.l.b16 %v899
  %v1627 = vunpack.c.h.b16 %v899
  %v1628 = vunpack.c.l.b16 %v900
  %v1629 = vunpack.c.h.b16 %v900
  %v1630 = vunpack.c.l.b16 %v901
  %v1631 = vunpack.c.l.b16 %v902
  %v1632 = vunpack.c.h.b16 %v902
  %v1633 = vunpack.c.l.b16 %v903
  %v1634 = vunpack.c.h.b16 %v903
  %v1635 = vunpack.c.l.b16 %v904
  %v1636 = vunpack.c.h.b16 %v904
  %v1637 = vunpack.c.l.b16 %v905
  %v1638 = vunpack.c.l.b16 %v906
  %v1639 = vunpack.c.h.b16 %v906
  %v1640 = vunpack.c.l.b16 %v907
  %v1641 = vunpack.c.h.b16 %v907
  %v1642 = vunpack.c.l.b16 %v908
  %v1643 = vunpack.c.h.b16 %v908
  %v1644 = vunpack.c.l.b16 %v909
  %v1645 = vunpack.c.l.b16 %v910
  %v1646 = vunpack.c.h.b16 %v910
  %v1647 = vunpack.c.l.b16 %v911
  %v1648 = vunpack.c.h.b16 %v911
  %v1649 = vunpack.c.l.b16 %v912
  %v1650 = vunpack.c.h.b16 %v912
  %v1651 = vunpack.c.l.b16 %v913
  %v1652 = vunpack.c.l.b16 %v914
  %v1653 = vunpack.c.h.b16 %v914
  %v1654 = vunpack.c.l.b16 %v915
  %v1655 = vunpack.c.h.b16 %v915
  %v1656 = vunpack.c.l.b16 %v916
  %v1657 = vunpack.c.h.b16 %v916
  %v1658 = vunpack.c.l.b16 %v917
  %v1659 = vpack.c.b16 %v1218, %v1211
  %v1660 = vpack.c.b16 %v1219, %v1212
  %v1661 = vpack.c.b16 %v1220, %v1213
  %v1662 = vpack.c.b16 %v1221, %v1214
  %v1663 = vpack.c.b16 %v1222, %v1215
  %v1664 = vpack.c.b16 %v1223, %v1216
  %v1665 = vpack.c.b16 %v1224, %v1217
  %v1666 = vpack.c.b16 %v1232, %v1225
  %v1667 = vpack.c.b16 %v1233, %v1226
  %v1668 = vpack.c.b16 %v1234, %v1227
  %v1669 = vpack.c.b16 %v1235, %v1228
  %v1670 = vpack.c.b16 %v1236, %v1229
  %v1671 = vpack.c.b16 %v1237, %v1230
  %v1672 = vpack.c.b16 %v1238, %v1231
  %v1673 = vpack.c.b16 %v1246, %v1239
  %v1674 = vpack.c.b16 %v1247, %v1240
  %v1675 = vpack.c.b16 %v1248, %v1241
  %v1676 = vpack.c.b16 %v1249, %v1242
  %v1677 = vpack.c.b16 %v1250, %v1243
  %v1678 = vpack.c.b16 %v1251, %v1244
  %v1679 = vpack.c.b16 %v1252, %v1245
  %v1680 = vpack.c.b16 %v1260, %v1253
  %v1681 = vpack.c.b16 %v1261, %v1254
  %v1682 = vpack.c.b16 %v1262, %v1255
  %v1683 = vpack.c.b16 %v1263, %v1256
  %v1684 = vpack.c.b16 %v1264, %v1257
  %v1685 = vpack.c.b16 %v1265, %v1258
  %v1686 = vpack.c.b16 %v1266, %v1259
  %v1687 = vpack.c.b16 %v1274, %v1267
  %v1688 = vpack.c.b16 %v1275, %v1268
  %v1689 = vpack.c.b16 %v1276, %v1269
  %v1690 = vpack.c.b16 %v1277, %v1270
  %v1691 = vpack.c.b16 %v1278, %v1271
  %v1692 = vpack.c.b16 %v1279, %v1272
  %v1693 = vpack.c.b16 %v1280, %v1273
  %v1694 = vpack.c.b16 %v1288, %v1281
  %v1695 = vpack.c.b16 %v1289, %v1282
  %v1696 = vpack.c.b16 %v1290, %v1283
  %v1697 = vpack.c.b16 %v1291, %v1284
  %v1698 = vpack.c.b16 %v1292, %v1285
  %v1699 = vpack.c.b16 %v1293, %v1286
  %v1700 = vpack.c.b16 %v1294, %v1287
  %v1701 = vpack.c.b16 %v1302, %v1295
  %v1702 = vpack.c.b16 %v1303, %v1296
  %v1703 = vpack.c.b16 %v1304, %v1297
  %v1704 = vpack.c.b16 %v1305, %v1298
  %v1705 = vpack.c.b16 %v1306, %v1299
  %v1706 = vpack.c.b16 %v1307, %v1300
  %v1707 = vpack.c.b16 %v1308, %v1301
  %v1708 = vpack.c.b16 %v1316, %v1309
  %v1709 = vpack.c.b16 %v1317, %v1310
  %v1710 = vpack.c.b16 %v1318, %v1311
  %v1711 = vpack.c.b16 %v1319, %v1312
  %v1712 = vpack.c.b16 %v1320, %v1313
  %v1713 = vpack.c.b16 %v1321, %v1314
  %v1714 = vpack.c.b16 %v1322, %v1315
  %v1715 = vpack.c.b16 %v1330, %v1323
  %v1716 = vpack.c.b16 %v1331, %v1324
  %v1717 = vpack.c.b16 %v1332, %v1325
  %v1718 = vpack.c.b16 %v1333, %v1326
  %v1719 = vpack.c.b16 %v1334, %v1327
  %v1720 = vpack.c.b16 %v1335, %v1328
  %v1721 = vpack.c.b16 %v1336, %v1329
  %v1722 = vpack.c.b16 %v1344, %v1337
  %v1723 = vpack.c.b16 %v1345, %v1338
  %v1724 = vpack.c.b16 %v1346, %v1339
  %v1725 = vpack.c.b16 %v1347, %v1340
  %v1726 = vpack.c.b16 %v1348, %v1341
  %v1727 = vpack.c.b16 %v1349, %v1342
  %v1728 = vpack.c.b16 %v1350, %v1343
  %v1729 = vpack.c.b16 %v1358, %v1351
  %v1730 = vpack.c.b16 %v1359, %v1352
  %v1731 = vpack.c.b16 %v1360, %v1353
  %v1732 = vpack.c.b16 %v1361, %v1354
  %v1733 = vpack.c.b16 %v1362, %v1355
  %v1734 = vpack.c.b16 %v1363, %v1356
  %v1735 = vpack.c.b16 %v1364, %v1357
  %v1736 = vpack.c.b16 %v1372, %v1365
  %v1737 = vpack.c.b16 %v1373, %v1366
  %v1738 = vpack.c.b16 %v1374, %v1367
  %v1739 = vpack.c.b16 %v1375, %v1368
  %v1740 = vpack.c.b16 %v1376, %v1369
  %v1741 = vpack.c.b16 %v1377, %v1370
  %v1742 = vpack.c.b16 %v1378, %v1371
  %v1743 = vpack.c.b16 %v1386, %v1379
  %v1744 = vpack.c.b16 %v1387, %v1380
  %v1745 = vpack.c.b16 %v1388, %v1381
  %v1746 = vpack.c.b16 %v1389, %v1382
  %v1747 = vpack.c.b16 %v1390, %v1383
  %v1748 = vpack.c.b16 %v1391, %v1384
  %v1749 = vpack.c.b16 %v1392, %v1385
  %v1750 = vpack.c.b16 %v1400, %v1393
  %v1751 = vpack.c.b16 %v1401, %v1394
  %v1752 = vpack.c.b16 %v1402, %v1395
  %v1753 = vpack.c.b16 %v1403, %v1396
  %v1754 = vpack.c.b16 %v1404, %v1397
  %v1755 = vpack.c.b16 %v1405, %v1398
  %v1756 = vpack.c.b16 %v1406, %v1399
  %v1757 = vpack.c.b16 %v1414, %v1407
  %v1758 = vpack.c.b16 %v1415, %v1408
  %v1759 = vpack.c.b16 %v1416, %v1409
  %v1760 = vpack.c.b16 %v1417, %v1410
  %v1761 = vpack.c.b16 %v1418, %v1411
  %v1762 = vpack.c.b16 %v1419, %v1412
  %v1763 = vpack.c.b16 %v1420, %v1413
  %v1764 = vpack.c.b16 %v1428, %v1421
  %v1765 = vpack.c.b16 %v1429, %v1422
  %v1766 = vpack.c.b16 %v1430, %v1423
  %v1767 = vpack.c.b16 %v1431, %v1424
  %v1768 = vpack.c.b16 %v1432, %v1425
  %v1769 = vpack.c.b16 %v1433, %v1426
  %v1770 = vpack.c.b16 %v1434, %v1427
  %v1771 = vpack.c.b16 %v1442, %v1435
  %v1772 = vpack.c.b16 %v1443, %v1436
  %v1773 = vpack.c.b16 %v1444, %v1437
  %v1774 = vpack.c.b16 %v1445, %v1438
  %v1775 = vpack.c.b16 %v1446, %v1439
  %v1776 = vpack.c.b16 %v1447, %v1440
  %v1777 = vpack.c.b16 %v1448, %v1441
  %v1778 = vpack.c.b16 %v1456, %v1449
  %v1779 = vpack.c.b16 %v1457, %v1450
  %v1780 = vpack.c.b16 %v1458, %v1451
  %v1781 = vpack.c.b16 %v1459, %v1452
  %v1782 = vpack.c.b16 %v1460, %v1453
  %v1783 = vpack.c.b16 %v1461, %v1454
  %v1784 = vpack.c.b16 %v1462, %v1455
  %v1785 = vpack.c.b16 %v1470, %v1463
  %v1786 = vpack.c.b16 %v1471, %v1464
  %v1787 = vpack.c.b16 %v1472, %v1465
  %v1788 = vpack.c.b16 %v1473, %v1466
  %v1789 = vpack.c.b16 %v1474, %v1467
  %v1790 = vpack.c.b16 %v1475, %v1468
  %v1791 = vpack.c.b16 %v1476, %v1469
  %v1792 = vpack.c.b16 %v1484, %v1477
  %v1793 = vpack.c.b16 %v1485, %v1478
  %v1794 = vpack.c.b16 %v1486, %v1479
  %v1795 = vpack.c.b16 %v1487, %v1480
  %v1796 = vpack.c.b16 %v1488, %v1481
  %v1797 = vpack.c.b16 %v1489, %v1482
  %v1798 = vpack.c.b16 %v1490, %v1483
  %v1799 = vpack.c.b16 %v1498, %v1491
  %v1800 = vpack.c.b16 %v1499, %v1492
  %v1801 = vpack.c.b16 %v1500, %v1493
  %v1802 = vpack.c.b16 %v1501, %v1494
  %v1803 = vpack.c.b16 %v1502, %v1495
  %v1804 = vpack.c.b16 %v1503, %v1496
  %v1805 = vpack.c.b16 %v1504, %v1497
  %v1806 = vpack.c.b16 %v1512, %v1505
  %v1807 = vpack.c.b16 %v1513, %v1506
  %v1808 = vpack.c.b16 %v1514, %v1507
  %v1809 = vpack.c.b16 %v1515, %v1508
  %v1810 = vpack.c.b16 %v1516, %v1509
  %v1811 = vpack.c.b16 %v1517, %v1510
  %v1812 = vpack.c.b16 %v1518, %v1511
  %v1813 = vpack.c.b16 %v1526, %v1519
  %v1814 = vpack.c.b16 %v1527, %v1520
  %v1815 = vpack.c.b16 %v1528, %v1521
  %v1816 = vpack.c.b16 %v1529, %v1522
  %v1817 = vpack.c.b16 %v1530, %v1523
  %v1818 = vpack.c.b16 %v1531, %v1524
  %v1819 = vpack.c.b16 %v1532, %v1525
  %v1820 = vpack.c.b16 %v1540, %v1533
  %v1821 = vpack.c.b16 %v1541, %v1534
  %v1822 = vpack.c.b16 %v1542, %v1535
  %v1823 = vpack.c.b16 %v1543, %v1536
  %v1824 = vpack.c.b16 %v1544, %v1537
  %v1825 = vpack.c.b16 %v1545, %v1538
  %v1826 = vpack.c.b16 %v1546, %v1539
  %v1827 = vpack.c.b16 %v1554, %v1547
  %v1828 = vpack.c.b16 %v1555, %v1548
  %v1829 = vpack.c.b16 %v1556, %v1549
  %v1830 = vpack.c.b16 %v1557, %v1550
  %v1831 = vpack.c.b16 %v1558, %v1551
  %v1832 = vpack.c.b16 %v1559, %v1552
  %v1833 = vpack.c.b16 %v1560, %v1553
  %v1834 = vpack.c.b16 %v1568, %v1561
  %v1835 = vpack.c.b16 %v1569, %v1562
  %v1836 = vpack.c.b16 %v1570, %v1563
  %v1837 = vpack.c.b16 %v1571, %v1564
  %v1838 = vpack.c.b16 %v1572, %v1565
  %v1839 = vpack.c.b16 %v1573, %v1566
  %v1840 = vpack.c.b16 %v1574, %v1567
  %v1841 = vpack.c.b16 %v1582, %v1575
  %v1842 = vpack.c.b16 %v1583, %v1576
  %v1843 = vpack.c.b16 %v1584, %v1577
  %v1844 = vpack.c.b16 %v1585, %v1578
  %v1845 = vpack.c.b16 %v1586, %v1579
  %v1846 = vpack.c.b16 %v1587, %v1580
  %v1847 = vpack.c.b16 %v1588, %v1581
  %v1848 = vpack.c.b16 %v1596, %v1589
  %v1849 = vpack.c.b16 %v1597, %v1590
  %v1850 = vpack.c.b16 %v1598, %v1591
  %v1851 = vpack.c.b16 %v1599, %v1592
  %v1852 = vpack.c.b16 %v1600, %v1593
  %v1853 = vpack.c.b16 %v1601, %v1594
  %v1854 = vpack.c.b16 %v1602, %v1595
  %v1855 = vpack.c.b16 %v1610, %v1603
  %v1856 = vpack.c.b16 %v1611, %v1604
  %v1857 = vpack.c.b16 %v1612, %v1605
  %v1858 = vpack.c.b16 %v1613, %v1606
  %v1859 = vpack.c.b16 %v1614, %v1607
  %v1860 = vpack.c.b16 %v1615, %v1608
  %v1861 = vpack.c.b16 %v1616, %v1609
  %v1862 = vpack.c.b16 %v1624, %v1617
  %v1863 = vpack.c.b16 %v1625, %v1618
  %v1864 = vpack.c.b16 %v1626, %v1619
  %v1865 = vpack.c.b16 %v1627, %v1620
  %v1866 = vpack.c.b16 %v1628, %v1621
  %v1867 = vpack.c.b16 %v1629, %v1622
  %v1868 = vpack.c.b16 %v1630, %v1623
  %v1869 = vpack.c.b16 %v1638, %v1631
  %v1870 = vpack.c.b16 %v1639, %v1632
  %v1871 = vpack.c.b16 %v1640, %v1633
  %v1872 = vpack.c.b16 %v1641, %v1634
  %v1873 = vpack.c.b16 %v1642, %v1635
  %v1874 = vpack.c.b16 %v1643, %v1636
  %v1875 = vpack.c.b16 %v1644, %v1637
  %v1876 = vpack.c.b16 %v1652, %v1645
  %v1877 = vpack.c.b16 %v1653, %v1646
  %v1878 = vpack.c.b16 %v1654, %v1647
  %v1879 = vpack.c.b16 %v1655, %v1648
  %v1880 = vpack.c.b16 %v1656, %v1649
  %v1881 = vpack.c.b16 %v1657, %v1650
  %v1882 = vpack.c.b16 %v1658, %v1651
  %2107 = vmatprep.subr.bf16.mxu0 %v1660
  %2108 = vmatpush1.bf16.msra.mxu0 %v1659
  %2109 = vmatprep.subr.bf16.mxu0 %v1667
  %2110 = vmatpush1.bf16.msra.mxu0 %v1666
  %2111 = vmatprep.subr.bf16.mxu0 %v1674
  %2112 = vmatpush1.bf16.msra.mxu0 %v1673
  %2113 = vmatprep.subr.bf16.mxu0 %v1681
  %2114 = vmatpush1.bf16.msra.mxu0 %v1680
  %2115 = vmatprep.subr.bf16.mxu0 %v1688
  %2116 = vmatpush1.bf16.msra.mxu0 %v1687
  %2117 = vmatprep.subr.bf16.mxu0 %v1695
  %2118 = vmatpush1.bf16.msra.mxu0 %v1694
  %2119 = vmatprep.subr.bf16.mxu0 %v1702
  %2120 = vmatpush1.bf16.msra.mxu0 %v1701
  %2121 = vmatprep.subr.bf16.mxu0 %v1709
  %2122 = vmatpush1.bf16.msra.mxu0 %v1708
  %2123 = vmatprep.subr.bf16.mxu0 %v1716
  %2124 = vmatpush1.bf16.msra.mxu0 %v1715
  %2125 = vmatprep.subr.bf16.mxu0 %v1723
  %2126 = vmatpush1.bf16.msra.mxu0 %v1722
  %2127 = vmatprep.subr.bf16.mxu0 %v1730
  %2128 = vmatpush1.bf16.msra.mxu0 %v1729
  %2129 = vmatprep.subr.bf16.mxu0 %v1737
  %2130 = vmatpush1.bf16.msra.mxu0 %v1736
  %2131 = vmatprep.subr.bf16.mxu0 %v1744
  %2132 = vmatpush1.bf16.msra.mxu0 %v1743
  %2133 = vmatprep.subr.bf16.mxu0 %v1751
  %2134 = vmatpush1.bf16.msra.mxu0 %v1750
  %2135 = vmatprep.subr.bf16.mxu0 %v1758
  %2136 = vmatpush1.bf16.msra.mxu0 %v1757
  %2137 = vmatprep.subr.bf16.mxu0 %v1765
  %2138 = vmatpush1.bf16.msra.mxu0 %v1764
  %2139 = vmatprep.mubr.bf16.mxu0 %v659
  %2140 = vmatmul.mubr.bf16.gmra.mrb[0].mxu0 %v658
  %v2141 = vpop.f32.mrb[0].mxu0
  %v2142 = vadd.f32 %v923, %v2141
  %v2143 = vpop.f32.mrb[0].mxu0
  %v2144 = vadd.f32 %v927, %v2143
  %v2145 = vpop.f32.mrb[0].mxu0
  %v2146 = vpop.f32.mrb[0].mxu0
  %2147 = vdwg.mxu0
  %2148 = vmatprep.subr.bf16.mxu0 %v1772
  %2149 = vmatpush1.bf16.msra.mxu0 %v1771
  %2150 = vmatprep.subr.bf16.mxu0 %v1779
  %2151 = vmatpush1.bf16.msra.mxu0 %v1778
  %2152 = vmatprep.subr.bf16.mxu0 %v1786
  %2153 = vmatpush1.bf16.msra.mxu0 %v1785
  %2154 = vmatprep.subr.bf16.mxu0 %v1793
  %2155 = vmatpush1.bf16.msra.mxu0 %v1792
  %2156 = vmatprep.subr.bf16.mxu0 %v1800
  %2157 = vmatpush1.bf16.msra.mxu0 %v1799
  %2158 = vmatprep.subr.bf16.mxu0 %v1807
  %2159 = vmatpush1.bf16.msra.mxu0 %v1806
  %2160 = vmatprep.subr.bf16.mxu0 %v1814
  %2161 = vmatpush1.bf16.msra.mxu0 %v1813
  %2162 = vmatprep.subr.bf16.mxu0 %v1821
  %2163 = vmatpush1.bf16.msra.mxu0 %v1820
  %2164 = vmatprep.subr.bf16.mxu0 %v1828
  %2165 = vmatpush1.bf16.msra.mxu0 %v1827
  %2166 = vmatprep.subr.bf16.mxu0 %v1835
  %2167 = vmatpush1.bf16.msra.mxu0 %v1834
  %2168 = vmatprep.subr.bf16.mxu0 %v1842
  %2169 = vmatpush1.bf16.msra.mxu0 %v1841
  %2170 = vmatprep.subr.bf16.mxu0 %v1849
  %2171 = vmatpush1.bf16.msra.mxu0 %v1848
  %2172 = vmatprep.subr.bf16.mxu0 %v1856
  %2173 = vmatpush1.bf16.msra.mxu0 %v1855
  %2174 = vmatprep.subr.bf16.mxu0 %v1863
  %2175 = vmatpush1.bf16.msra.mxu0 %v1862
  %2176 = vmatprep.subr.bf16.mxu0 %v1870
  %2177 = vmatpush1.bf16.msra.mxu0 %v1869
  %2178 = vmatprep.subr.bf16.mxu0 %v1877
  %2179 = vmatpush1.bf16.msra.mxu0 %v1876
  %2180 = vmatprep.mubr.bf16.mxu0 %v661
  %2181 = vmatmul.mubr.bf16.gmra.mrb[0].mxu0 %v660
  %v2182 = vpop.f32.mrb[0].mxu0
  %v2183 = vadd.f32 %v2142, %v2182
  %v2184 = vpop.f32.mrb[0].mxu0
  %v2185 = vadd.f32 %v2144, %v2184
  %v2186 = vpop.f32.mrb[0].mxu0
  %v2187 = vpop.f32.mrb[0].mxu0
  %2188 = vdwg.mxu0
  %2189 = vmatprep.subr.bf16.mxu0 %v1662
  %2190 = vmatpush1.bf16.msra.mxu0 %v1661
  %2191 = vmatprep.subr.bf16.mxu0 %v1669
  %2192 = vmatpush1.bf16.msra.mxu0 %v1668
  %2193 = vmatprep.subr.bf16.mxu0 %v1676
  %2194 = vmatpush1.bf16.msra.mxu0 %v1675
  %2195 = vmatprep.subr.bf16.mxu0 %v1683
  %2196 = vmatpush1.bf16.msra.mxu0 %v1682
  %2197 = vmatprep.subr.bf16.mxu0 %v1690
  %2198 = vmatpush1.bf16.msra.mxu0 %v1689
  %2199 = vmatprep.subr.bf16.mxu0 %v1697
  %2200 = vmatpush1.bf16.msra.mxu0 %v1696
  %2201 = vmatprep.subr.bf16.mxu0 %v1704
  %2202 = vmatpush1.bf16.msra.mxu0 %v1703
  %2203 = vmatprep.subr.bf16.mxu0 %v1711
  %2204 = vmatpush1.bf16.msra.mxu0 %v1710
  %2205 = vmatprep.subr.bf16.mxu0 %v1718
  %2206 = vmatpush1.bf16.msra.mxu0 %v1717
  %2207 = vmatprep.subr.bf16.mxu0 %v1725
  %2208 = vmatpush1.bf16.msra.mxu0 %v1724
  %2209 = vmatprep.subr.bf16.mxu0 %v1732
  %2210 = vmatpush1.bf16.msra.mxu0 %v1731
  %2211 = vmatprep.subr.bf16.mxu0 %v1739
  %2212 = vmatpush1.bf16.msra.mxu0 %v1738
  %2213 = vmatprep.subr.bf16.mxu0 %v1746
  %2214 = vmatpush1.bf16.msra.mxu0 %v1745
  %2215 = vmatprep.subr.bf16.mxu0 %v1753
  %2216 = vmatpush1.bf16.msra.mxu0 %v1752
  %2217 = vmatprep.subr.bf16.mxu0 %v1760
  %2218 = vmatpush1.bf16.msra.mxu0 %v1759
  %2219 = vmatprep.subr.bf16.mxu0 %v1767
  %2220 = vmatpush1.bf16.msra.mxu0 %v1766
  %2221 = vmatprep.mubr.bf16.mxu0 %v659
  %2222 = vmatmul.mubr.bf16.gmra.mrb[0].mxu0 %v658
  %v2223 = vpop.f32.mrb[0].mxu0
  %v2224 = vadd.f32 %v931, %v2223
  %v2225 = vpop.f32.mrb[0].mxu0
  %v2226 = vadd.f32 %v935, %v2225
  %v2227 = vpop.f32.mrb[0].mxu0
  %v2228 = vpop.f32.mrb[0].mxu0
  %2229 = vdwg.mxu0
  %2230 = vmatprep.subr.bf16.mxu0 %v1774
  %2231 = vmatpush1.bf16.msra.mxu0 %v1773
  %2232 = vmatprep.subr.bf16.mxu0 %v1781
  %2233 = vmatpush1.bf16.msra.mxu0 %v1780
  %2234 = vmatprep.subr.bf16.mxu0 %v1788
  %2235 = vmatpush1.bf16.msra.mxu0 %v1787
  %2236 = vmatprep.subr.bf16.mxu0 %v1795
  %2237 = vmatpush1.bf16.msra.mxu0 %v1794
  %2238 = vmatprep.subr.bf16.mxu0 %v1802
  %2239 = vmatpush1.bf16.msra.mxu0 %v1801
  %2240 = vmatprep.subr.bf16.mxu0 %v1809
  %2241 = vmatpush1.bf16.msra.mxu0 %v1808
  %2242 = vmatprep.subr.bf16.mxu0 %v1816
  %2243 = vmatpush1.bf16.msra.mxu0 %v1815
  %2244 = vmatprep.subr.bf16.mxu0 %v1823
  %2245 = vmatpush1.bf16.msra.mxu0 %v1822
  %2246 = vmatprep.subr.bf16.mxu0 %v1830
  %2247 = vmatpush1.bf16.msra.mxu0 %v1829
  %2248 = vmatprep.subr.bf16.mxu0 %v1837
  %2249 = vmatpush1.bf16.msra.mxu0 %v1836
  %2250 = vmatprep.subr.bf16.mxu0 %v1844
  %2251 = vmatpush1.bf16.msra.mxu0 %v1843
  %2252 = vmatprep.subr.bf16.mxu0 %v1851
  %2253 = vmatpush1.bf16.msra.mxu0 %v1850
  %2254 = vmatprep.subr.bf16.mxu0 %v1858
  %2255 = vmatpush1.bf16.msra.mxu0 %v1857
  %2256 = vmatprep.subr.bf16.mxu0 %v1865
  %2257 = vmatpush1.bf16.msra.mxu0 %v1864
  %2258 = vmatprep.subr.bf16.mxu0 %v1872
  %2259 = vmatpush1.bf16.msra.mxu0 %v1871
  %2260 = vmatprep.subr.bf16.mxu0 %v1879
  %2261 = vmatpush1.bf16.msra.mxu0 %v1878
  %2262 = vmatprep.mubr.bf16.mxu0 %v661
  %2263 = vmatmul.mubr.bf16.gmra.mrb[0].mxu0 %v660
  %v2264 = vpop.f32.mrb[0].mxu0
  %v2265 = vadd.f32 %v2224, %v2264
  %v2266 = vpop.f32.mrb[0].mxu0
  %v2267 = vadd.f32 %v2226, %v2266
  %v2268 = vpop.f32.mrb[0].mxu0
  %v2269 = vpop.f32.mrb[0].mxu0
  %2270 = vdwg.mxu0
  %2271 = vmatprep.subr.bf16.mxu0 %v1664
  %2272 = vmatpush1.bf16.msra.mxu0 %v1663
  %2273 = vmatprep.subr.bf16.mxu0 %v1671
  %2274 = vmatpush1.bf16.msra.mxu0 %v1670
  %2275 = vmatprep.subr.bf16.mxu0 %v1678
  %2276 = vmatpush1.bf16.msra.mxu0 %v1677
  %2277 = vmatprep.subr.bf16.mxu0 %v1685
  %2278 = vmatpush1.bf16.msra.mxu0 %v1684
  %2279 = vmatprep.subr.bf16.mxu0 %v1692
  %2280 = vmatpush1.bf16.msra.mxu0 %v1691
  %2281 = vmatprep.subr.bf16.mxu0 %v1699
  %2282 = vmatpush1.bf16.msra.mxu0 %v1698
  %2283 = vmatprep.subr.bf16.mxu0 %v1706
  %2284 = vmatpush1.bf16.msra.mxu0 %v1705
  %2285 = vmatprep.subr.bf16.mxu0 %v1713
  %2286 = vmatpush1.bf16.msra.mxu0 %v1712
  %2287 = vmatprep.subr.bf16.mxu0 %v1720
  %2288 = vmatpush1.bf16.msra.mxu0 %v1719
  %2289 = vmatprep.subr.bf16.mxu0 %v1727
  %2290 = vmatpush1.bf16.msra.mxu0 %v1726
  %2291 = vmatprep.subr.bf16.mxu0 %v1734
  %2292 = vmatpush1.bf16.msra.mxu0 %v1733
  %2293 = vmatprep.subr.bf16.mxu0 %v1741
  %2294 = vmatpush1.bf16.msra.mxu0 %v1740
  %2295 = vmatprep.subr.bf16.mxu0 %v1748
  %2296 = vmatpush1.bf16.msra.mxu0 %v1747
  %2297 = vmatprep.subr.bf16.mxu0 %v1755
  %2298 = vmatpush1.bf16.msra.mxu0 %v1754
  %2299 = vmatprep.subr.bf16.mxu0 %v1762
  %2300 = vmatpush1.bf16.msra.mxu0 %v1761
  %2301 = vmatprep.subr.bf16.mxu0 %v1769
  %2302 = vmatpush1.bf16.msra.mxu0 %v1768
  %2303 = vmatprep.mubr.bf16.mxu0 %v659
  %2304 = vmatmul.mubr.bf16.gmra.mrb[0].mxu0 %v658
  %v2305 = vpop.f32.mrb[0].mxu0
  %v2306 = vadd.f32 %v939, %v2305
  %v2307 = vpop.f32.mrb[0].mxu0
  %v2308 = vadd.f32 %v943, %v2307
  %v2309 = vpop.f32.mrb[0].mxu0
  %v2310 = vpop.f32.mrb[0].mxu0
  %2311 = vdwg.mxu0
  %2312 = vmatprep.subr.bf16.mxu0 %v1776
  %2313 = vmatpush1.bf16.msra.mxu0 %v1775
  %2314 = vmatprep.subr.bf16.mxu0 %v1783
  %2315 = vmatpush1.bf16.msra.mxu0 %v1782
  %2316 = vmatprep.subr.bf16.mxu0 %v1790
  %2317 = vmatpush1.bf16.msra.mxu0 %v1789
  %2318 = vmatprep.subr.bf16.mxu0 %v1797
  %2319 = vmatpush1.bf16.msra.mxu0 %v1796
  %2320 = vmatprep.subr.bf16.mxu0 %v1804
  %2321 = vmatpush1.bf16.msra.mxu0 %v1803
  %2322 = vmatprep.subr.bf16.mxu0 %v1811
  %2323 = vmatpush1.bf16.msra.mxu0 %v1810
  %2324 = vmatprep.subr.bf16.mxu0 %v1818
  %2325 = vmatpush1.bf16.msra.mxu0 %v1817
  %2326 = vmatprep.subr.bf16.mxu0 %v1825
  %2327 = vmatpush1.bf16.msra.mxu0 %v1824
  %2328 = vmatprep.subr.bf16.mxu0 %v1832
  %2329 = vmatpush1.bf16.msra.mxu0 %v1831
  %2330 = vmatprep.subr.bf16.mxu0 %v1839
  %2331 = vmatpush1.bf16.msra.mxu0 %v1838
  %2332 = vmatprep.subr.bf16.mxu0 %v1846
  %2333 = vmatpush1.bf16.msra.mxu0 %v1845
  %2334 = vmatprep.subr.bf16.mxu0 %v1853
  %2335 = vmatpush1.bf16.msra.mxu0 %v1852
  %2336 = vmatprep.subr.bf16.mxu0 %v1860
  %2337 = vmatpush1.bf16.msra.mxu0 %v1859
  %2338 = vmatprep.subr.bf16.mxu0 %v1867
  %2339 = vmatpush1.bf16.msra.mxu0 %v1866
  %2340 = vmatprep.subr.bf16.mxu0 %v1874
  %2341 = vmatpush1.bf16.msra.mxu0 %v1873
  %2342 = vmatprep.subr.bf16.mxu0 %v1881
  %2343 = vmatpush1.bf16.msra.mxu0 %v1880
  %2344 = vmatprep.mubr.bf16.mxu0 %v661
  %2345 = vmatmul.mubr.bf16.gmra.mrb[0].mxu0 %v660
  %v2346 = vpop.f32.mrb[0].mxu0
  %v2347 = vadd.f32 %v2306, %v2346
  %v2348 = vpop.f32.mrb[0].mxu0
  %v2349 = vadd.f32 %v2308, %v2348
  %v2350 = vpop.f32.mrb[0].mxu0
  %v2351 = vpop.f32.mrb[0].mxu0
  %2352 = vdwg.mxu0
  %2353 = vmatprep.subr.bf16.mxu0 0
  %2354 = vmatpush1.bf16.msra.mxu0 %v1665
  %2355 = vmatprep.subr.bf16.mxu0 0
  %2356 = vmatpush1.bf16.msra.mxu0 %v1672
  %2357 = vmatprep.subr.bf16.mxu0 0
  %2358 = vmatpush1.bf16.msra.mxu0 %v1679
  %2359 = vmatprep.subr.bf16.mxu0 0
  %2360 = vmatpush1.bf16.msra.mxu0 %v1686
  %2361 = vmatprep.subr.bf16.mxu0 0
  %2362 = vmatpush1.bf16.msra.mxu0 %v1693
  %2363 = vmatprep.subr.bf16.mxu0 0
  %2364 = vmatpush1.bf16.msra.mxu0 %v1700
  %2365 = vmatprep.subr.bf16.mxu0 0
  %2366 = vmatpush1.bf16.msra.mxu0 %v1707
  %2367 = vmatprep.subr.bf16.mxu0 0
  %2368 = vmatpush1.bf16.msra.mxu0 %v1714
  %2369 = vmatprep.subr.bf16.mxu0 0
  %2370 = vmatpush1.bf16.msra.mxu0 %v1721
  %2371 = vmatprep.subr.bf16.mxu0 0
  %2372 = vmatpush1.bf16.msra.mxu0 %v1728
  %2373 = vmatprep.subr.bf16.mxu0 0
  %2374 = vmatpush1.bf16.msra.mxu0 %v1735
  %2375 = vmatprep.subr.bf16.mxu0 0
  %2376 = vmatpush1.bf16.msra.mxu0 %v1742
  %2377 = vmatprep.subr.bf16.mxu0 0
  %2378 = vmatpush1.bf16.msra.mxu0 %v1749
  %2379 = vmatprep.subr.bf16.mxu0 0
  %2380 = vmatpush1.bf16.msra.mxu0 %v1756
  %2381 = vmatprep.subr.bf16.mxu0 0
  %2382 = vmatpush1.bf16.msra.mxu0 %v1763
  %2383 = vmatprep.subr.bf16.mxu0 0
  %2384 = vmatpush1.bf16.msra.mxu0 %v1770
  %2385 = vmatprep.mubr.bf16.mxu0 %v659
  %2386 = vmatmul.mubr.bf16.gmra.mrb[0].mxu0 %v658
  %v2387 = vpop.f32.mrb[0].mxu0
  %v2388 = vadd.f32 %v947, %v2387
  %v2389 = vpop.f32.mrb[0].mxu0
  %v2390 = vpop.f32.mrb[0].mxu0
  %v2391 = vpop.f32.mrb[0].mxu0
  %2392 = vdwg.mxu0
  %2393 = vmatprep.subr.bf16.mxu0 0
  %2394 = vmatpush1.bf16.msra.mxu0 %v1777
  %2395 = vmatprep.subr.bf16.mxu0 0
  %2396 = vmatpush1.bf16.msra.mxu0 %v1784
  %2397 = vmatprep.subr.bf16.mxu0 0
  %2398 = vmatpush1.bf16.msra.mxu0 %v1791
  %2399 = vmatprep.subr.bf16.mxu0 0
  %2400 = vmatpush1.bf16.msra.mxu0 %v1798
  %2401 = vmatprep.subr.bf16.mxu0 0
  %2402 = vmatpush1.bf16.msra.mxu0 %v1805
  %2403 = vmatprep.subr.bf16.mxu0 0
  %2404 = vmatpush1.bf16.msra.mxu0 %v1812
  %2405 = vmatprep.subr.bf16.mxu0 0
  %2406 = vmatpush1.bf16.msra.mxu0 %v1819
  %2407 = vmatprep.subr.bf16.mxu0 0
  %2408 = vmatpush1.bf16.msra.mxu0 %v1826
  %2409 = vmatprep.subr.bf16.mxu0 0
  %2410 = vmatpush1.bf16.msra.mxu0 %v1833
  %2411 = vmatprep.subr.bf16.mxu0 0
  %2412 = vmatpush1.bf16.msra.mxu0 %v1840
  %2413 = vmatprep.subr.bf16.mxu0 0
  %2414 = vmatpush1.bf16.msra.mxu0 %v1847
  %2415 = vmatprep.subr.bf16.mxu0 0
  %2416 = vmatpush1.bf16.msra.mxu0 %v1854
  %2417 = vmatprep.subr.bf16.mxu0 0
  %2418 = vmatpush1.bf16.msra.mxu0 %v1861
  %2419 = vmatprep.subr.bf16.mxu0 0
  %2420 = vmatpush1.bf16.msra.mxu0 %v1868
  %2421 = vmatprep.subr.bf16.mxu0 0
  %2422 = vmatpush1.bf16.msra.mxu0 %v1875
  %2423 = vmatprep.subr.bf16.mxu0 0
  %2424 = vmatpush1.bf16.msra.mxu0 %v1882
  %2425 = vmatprep.mubr.bf16.mxu0 %v661
  %2426 = vmatmul.mubr.bf16.gmra.mrb[0].mxu0 %v660
  %v2427 = vpop.f32.mrb[0].mxu0
  %v2428 = vadd.f32 %v2388, %v2427
  %v2429 = vpop.f32.mrb[0].mxu0
  %v2430 = vpop.f32.mrb[0].mxu0
  %v2431 = vpop.f32.mrb[0].mxu0
  %2432 = vdwg.mxu0
  %v2433 = vmul.f32 %v2183, 0.5
  %v2434 = vmul.f32 %v2185, 0.5
  %v2435 = vmul.f32 %v2265, 0.5
  %v2436 = vmul.f32 %v2267, 0.5
  %v2437 = vmul.f32 %v2347, 0.5
  %v2438 = vmul.f32 %v2349, 0.5
  %v2439 = vmul.f32 %v2428, 0.5
  %v2440 = vtanh.pop %v2433
  %v2441 = vtanh.pop %v2434
  %v2442 = vtanh.pop %v2435
  %v2443 = vtanh.pop %v2436
  %v2444 = vtanh.pop %v2437
  %v2445 = vtanh.pop %v2438
  %v2446 = vtanh.pop %v2439
  %v2447 = vmul.f32 %v2440, 0.5
  %v2448 = vmul.f32 %v2441, 0.5
  %v2449 = vmul.f32 %v2442, 0.5
  %v2450 = vmul.f32 %v2443, 0.5
  %v2451 = vmul.f32 %v2444, 0.5
  %v2452 = vmul.f32 %v2445, 0.5
  %v2453 = vmul.f32 %v2446, 0.5
  %v2454 = vadd.f32 %v2447, 0.5
  %v2455 = vadd.f32 %v2448, 0.5
  %v2456 = vadd.f32 %v2449, 0.5
  %v2457 = vadd.f32 %v2450, 0.5
  %v2458 = vadd.f32 %v2451, 0.5
  %v2459 = vadd.f32 %v2452, 0.5
  %v2460 = vadd.f32 %v2453, 0.5
  %2461 = vst [vmem:[%s9] sm:$0xff] %v2454
  %2462 = vst [vmem:[%s9 + $0x8] sm:$0xff] %v2455
  %2463 = vst [vmem:[%s9 + $0x10] sm:$0xff] %v2456
  %2464 = vst [vmem:[%s9 + $0x18] sm:$0xff] %v2457
  %2465 = vst [vmem:[%s9 + $0x20] sm:$0xff] %v2458
  %2466 = vst [vmem:[%s9 + $0x28] sm:$0xff] %v2459
  %vm2467 = vcmask 130048
  %2468 = vst.msk [vmem:[%s9 + $0x30] sm:$0xff] %vm2467, %v2460
  // Predicated region
  $region38: #{generator_forward.1} parent=0 // pred_check
    _
  $region39: #{generator_forward.1} parent=0 // pred_check_branch
    %2470 = sbr.rel (0) target = $region41
  $region40: #{generator_forward.1} parent=0 // pred_region
    _
  $region41: #{generator_forward.1} parent=0 // pred_fallthru
    _
  // Predicated region
  $region42: #{generator_forward.1} parent=0 // pred_check
    _
  $region43: #{generator_forward.1} parent=0 // pred_check_branch
    %2472 = sbr.rel (0) target = $region45
  $region44: #{generator_forward.1} parent=0 // pred_region
    _
  $region45: #{generator_forward.1} parent=0 // pred_fallthru
    _

</llo_original>
